<compile_context>
chip_gen: v5e
topology: v5e:2x2
jax: 0.10.0
libtpu: 0.0.40
codegen_flags: <defaults>
</compile_context>

<pallas_src>
import functools

import jax
import jax.numpy as jnp
from jax.experimental import pallas as pl
from jax.experimental.pallas import tpu as pltpu

NEG_SLOPE = 0.01  # nn.LeakyReLU() default negative_slope


def _round_up(x, m):
    return ((x + m - 1) // m) * m


def _const_spec(shape):
    """Whole-array block, same for every grid step (weights / biases)."""
    nd = len(shape)
    return pl.BlockSpec(shape, lambda b, i, _nd=nd: (0,) * _nd)


# --------------------------------- kernel -----------------------------------

def generator_kernel(x_ref, w1_ref, b1_ref, w2_ref, b2_ref, w3_ref, b3_ref,
                     w4_ref, b4_ref, out_ref, *, tile_l, seq_len):
    base = pl.program_id(1) * tile_l          # first global output row of this tile
    mm_dtype = w2_ref.dtype                   # bf16 (default) or f32

    def leaky(v):
        return jnp.where(v >= 0, v, NEG_SLOPE * v)

    def mask_rows(h, off):
        # Zero rows whose *global* sequence index is outside [0, seq_len).  This is
        # exactly the 'same' zero padding each subsequent conv expects for its input.
        g = jax.lax.broadcasted_iota(jnp.int32, (h.shape[0], 1), 0) + (base - off)
        return jnp.where(jnp.logical_and(g >= 0, g < seq_len), h, 0.0)

    def tap_conv(h, w_ref, b_ref, lout):
        # 'valid' K=3 conv on the halo'ed tile: 3 row-shifted matmuls, f32 accumulation.
        hb = h.astype(mm_dtype)
        acc = jnp.dot(hb[0:lout, :], w_ref[0], preferred_element_type=jnp.float32)
        acc = acc + jnp.dot(hb[1:lout + 1, :], w_ref[1],
                            preferred_element_type=jnp.float32)
        acc = acc + jnp.dot(hb[2:lout + 2, :], w_ref[2],
                            preferred_element_type=jnp.float32)
        return acc + b_ref[...]

    # layer 1: taps folded into the contraction (im2col built in the wrapper):
    #   (TL+6, 120) @ (120, 256)
    h = jnp.dot(x_ref[...], w1_ref[...],
                preferred_element_type=jnp.float32) + b1_ref[...]
    h = mask_rows(leaky(h), 3)                                          # (TL+6, 256)

    h = mask_rows(leaky(tap_conv(h, w2_ref, b2_ref, tile_l + 4)), 2)    # (TL+4, 128)
    h = mask_rows(leaky(tap_conv(h, w3_ref, b3_ref, tile_l + 2)), 1)    # (TL+2, 64)
    y = tap_conv(h, w4_ref, b4_ref, tile_l)                             # (TL, 2), no act
    out_ref[...] = y.astype(out_ref.dtype)


# --------------------------------- wrapper ----------------------------------

def generator_conditional_forward(z, conditioning, params, *, tile_rows=256,
                                  compute_dtype=jnp.bfloat16):
    """z: (B, L, Cz), conditioning: (B, L, Cc), Cz + Cc = 24  ->  (B, L, 2)."""
    zc = jnp.concatenate([z, conditioning], axis=-1).astype(jnp.float32)  # (B, L, 24)
    B, L, Cin = zc.shape
    assert Cin == 24
    assert tile_rows % 8 == 0
    w1, b1, w2, b2, w3, b3, w4, b4 = params

    K1 = w1.shape[0]                               # 5
    H_PRE = (K1 - 1) // 2                          # layer-1 reach          (= 2)
    H_POST = ((w2.shape[0] - 1) // 2 + (w3.shape[0] - 1) // 2
              + (w4.shape[0] - 1) // 2)            # layers 2-4 reach       (= 3)

    tile_l = min(tile_rows, _round_up(L, 8))       # rows of final output per tile
    nt = (L + tile_l - 1) // tile_l
    L_pad = nt * tile_l
    Le = tile_l + 2 * H_POST                       # layer-1 output rows needed / tile
    ci = K1 * Cin                                  # im2col contraction depth = 120

    # Zero-pad the sequence and build the layer-1 im2col (channels -> 120 lanes).
    xp = jnp.zeros((B, L_pad + 2 * (H_PRE + H_POST), Cin), jnp.float32)
    xp = xp.at[:, H_PRE + H_POST: H_PRE + H_POST + L, :].set(zc)
    xi = jnp.concatenate([xp[:, k:k + L_pad + 2 * H_POST, :] for k in range(K1)],
                         axis=-1)                                  # (B, L_pad+6, 120)

    # Overlapping halo tiles: (B, nt, TL+6, 120), matmul-input dtype.
    x_tiles = jnp.stack(
        [xi[:, i * tile_l: i * tile_l + Le, :] for i in range(nt)], axis=1
    ).astype(compute_dtype)

    # Weight layout for the kernel: layer-1 taps flattened into the contraction.
    w1f = w1.reshape(ci, w1.shape[2]).astype(compute_dtype)        # (120, 256)
    w2c, w3c, w4c = (w.astype(compute_dtype) for w in (w2, w3, w4))
    b1f, b2f, b3f, b4f = (b.astype(jnp.float32) for b in (b1, b2, b3, b4))

    flops = 2 * B * L_pad * (K1 * Cin * 256 + 3 * 256 * 128 + 3 * 128 * 64 + 3 * 64 * 2)
    bytes_accessed = (int(x_tiles.size) * x_tiles.dtype.itemsize
                      + sum(int(a.size) * a.dtype.itemsize
                            for a in (w1f, w2c, w3c, w4c, b1f, b2f, b3f, b4f))
                      + B * nt * tile_l * 2 * 4)
    cost = pl.CostEstimate(flops=int(flops), transcendentals=0,
                           bytes_accessed=int(bytes_accessed))

    kernel = functools.partial(generator_kernel, tile_l=tile_l, seq_len=L)

    out_t = pl.pallas_call(
        kernel,
        out_shape=jax.ShapeDtypeStruct((B, nt, tile_l, 2), jnp.float32),
        grid=(B, nt),
        in_specs=[
            pl.BlockSpec((None, None, Le, ci), lambda b, i: (b, i, 0, 0)),
            _const_spec(w1f.shape), _const_spec(b1f.shape),
            _const_spec(w2c.shape), _const_spec(b2f.shape),
            _const_spec(w3c.shape), _const_spec(b3f.shape),
            _const_spec(w4c.shape), _const_spec(b4f.shape),
        ],
        out_specs=pl.BlockSpec((None, None, tile_l, 2), lambda b, i: (b, i, 0, 0)),
        compiler_params=pltpu.CompilerParams(
            dimension_semantics=("parallel", "parallel"),
            vmem_limit_bytes=32 * 1024 * 1024),
        cost_estimate=cost,
    )(x_tiles, w1f, b1f, w2c, b2f, w3c, b3f, w4c, b4f)

    return out_t.reshape(B, L_pad, 2)[:, :L, :]


# ------------------------- params + pure-JAX reference ----------------------

def init_params(key):
    """Deterministic synthetic weights; layout (K, Cin, Cout), bias (1, Cout)."""
    layer_defs = [(24, 256, 5), (256, 128, 3), (128, 64, 3), (64, 2, 3)]
    params = []
    keys = jax.random.split(key, 2 * len(layer_defs))
    for i, (cin, cout, k) in enumerate(layer_defs):
        bound = 1.0 / float(cin * k) ** 0.5
        w = jax.random.uniform(keys[2 * i], (k, cin, cout), jnp.float32, -bound, bound)
        b = jax.random.uniform(keys[2 * i + 1], (1, cout), jnp.float32, -bound, bound)
        params += [w, b]
    return params


def reference_forward(z, conditioning, params):
    """Pure-JAX (lax conv) reference of the PyTorch forward, channels-last output."""
    x = jnp.concatenate([z, conditioning], axis=-1).astype(jnp.float32)
    w1, b1, w2, b2, w3, b3, w4, b4 = params

    def conv(h, w, b):
        y = jax.lax.conv_general_dilated(
            h, w, window_strides=(1,), padding="SAME",
            dimension_numbers=("NHC", "HIO", "NHC"))
        return y + b[None]

    lrelu = lambda v: jnp.where(v >= 0, v, NEG_SLOPE * v)
    h = lrelu(conv(x, w1, b1))
    h = lrelu(conv(h, w2, b2))
    h = lrelu(conv(h, w3, b3))
    return conv(h, w4, b4)


# ----------------------------------- main ------------------------------------

if __name__ == "__main__":
    key = jax.random.PRNGKey(0)
    kp, kz, kc = jax.random.split(key, 3)

    B, L = 2, 16
    z = jax.random.normal(kz, (B, L, 12), jnp.float32)             # noise half
    conditioning = jax.random.normal(kc, (B, L, 12), jnp.float32)  # conditioning half
    params = init_params(kp)

    ref = jax.block_until_ready(reference_forward(z, conditioning, params))

    # Exact-arithmetic check of the halo / masking logic: f32 matmuls, forced
    # multi-tile path (tile_rows=8 -> 2 sequence tiles per batch element).
    out_f32 = jax.block_until_ready(
        generator_conditional_forward(z, conditioning, params,
                                      tile_rows=8, compute_dtype=jnp.float32))
    assert out_f32.shape == (B, L, 2), out_f32.shape
    assert jnp.allclose(out_f32, ref, atol=1e-3, rtol=1e-3), \
        float(jnp.max(jnp.abs(out_f32 - ref)))

    # Default fast path: bf16 MXU inputs, f32 accumulation / epilogue.
    out = jax.block_until_ready(generator_conditional_forward(z, conditioning, params))
    assert out.shape == (B, L, 2), out.shape
    assert jnp.allclose(out, ref, atol=3e-2, rtol=3e-2), \
        float(jnp.max(jnp.abs(out - ref)))

    print("KERNEL_OK")
</pallas_src>

<mosaic_0001>
module attributes {stable_mosaic.version = 11 : i64} {
  func.func @generator_kernel(%arg0: i32, %arg1: i32, %arg2: memref<1x1x14x120xf32, #tpu.memory_space<vmem>>, %arg3: memref<120x256xf32, #tpu.memory_space<vmem>>, %arg4: memref<1x256xf32, #tpu.memory_space<vmem>>, %arg5: memref<3x256x128xf32, #tpu.memory_space<vmem>>, %arg6: memref<1x128xf32, #tpu.memory_space<vmem>>, %arg7: memref<3x128x64xf32, #tpu.memory_space<vmem>>, %arg8: memref<1x64xf32, #tpu.memory_space<vmem>>, %arg9: memref<3x64x2xf32, #tpu.memory_space<vmem>>, %arg10: memref<1x2xf32, #tpu.memory_space<vmem>>, %arg11: memref<1x1x8x2xf32, #tpu.memory_space<vmem>>) attributes {dimension_semantics = [#tpu.dimension_semantics<parallel>, #tpu.dimension_semantics<parallel>], iteration_bounds = array<i64: 2, 2>, scalar_prefetch = 0 : i64, scratch_operands = 0 : i64, tpu.core_type = #tpu.core_type<tc>, window_params = [{transform_indices = @transform_0, window_bounds = array<i64: 1, 1, 14, 120>}, {pipeline_mode = #tpu.pipeline_mode<synchronous>, transform_indices = @transform_1, window_bounds = array<i64: 120, 256>}, {pipeline_mode = #tpu.pipeline_mode<synchronous>, transform_indices = @transform_2, window_bounds = array<i64: 1, 256>}, {pipeline_mode = #tpu.pipeline_mode<synchronous>, transform_indices = @transform_3, window_bounds = array<i64: 3, 256, 128>}, {pipeline_mode = #tpu.pipeline_mode<synchronous>, transform_indices = @transform_4, window_bounds = array<i64: 1, 128>}, {pipeline_mode = #tpu.pipeline_mode<synchronous>, transform_indices = @transform_5, window_bounds = array<i64: 3, 128, 64>}, {pipeline_mode = #tpu.pipeline_mode<synchronous>, transform_indices = @transform_6, window_bounds = array<i64: 1, 64>}, {pipeline_mode = #tpu.pipeline_mode<synchronous>, transform_indices = @transform_7, window_bounds = array<i64: 3, 64, 2>}, {pipeline_mode = #tpu.pipeline_mode<synchronous>, transform_indices = @transform_8, window_bounds = array<i64: 1, 2>}, {transform_indices = @transform_9, window_bounds = array<i64: 1, 1, 8, 2>}]} {
    %c8_i32 = arith.constant 8 : i32
    %0 = arith.muli %arg1, %c8_i32 : i32
    %c0 = arith.constant 0 : index
    %c0_0 = arith.constant 0 : index
    %c0_1 = arith.constant 0 : index
    %c0_2 = arith.constant 0 : index
    %1 = vector.load %arg2[%c0, %c0_0, %c0_1, %c0_2] : memref<1x1x14x120xf32, #tpu.memory_space<vmem>>, vector<1x1x14x120xf32>
    %2 = vector.shape_cast %1 : vector<1x1x14x120xf32> to vector<14x120xf32>
    %c0_3 = arith.constant 0 : index
    %c0_4 = arith.constant 0 : index
    %3 = vector.load %arg3[%c0_3, %c0_4] : memref<120x256xf32, #tpu.memory_space<vmem>>, vector<120x256xf32>
    %cst = arith.constant dense<0.000000e+00> : vector<14x256xf32>
    %4 = tpu.matmul %2, %3, %cst {dimension_numbers = #tpu.dot_dimension_numbers<[1], [0], [0], [1], [0, 0, 1, 1], [], []>} : vector<14x120xf32>, vector<120x256xf32>, vector<14x256xf32> -> vector<14x256xf32>
    %c0_5 = arith.constant 0 : index
    %c0_6 = arith.constant 0 : index
    %5 = vector.load %arg4[%c0_5, %c0_6] : memref<1x256xf32, #tpu.memory_space<vmem>>, vector<1x256xf32>
    %6 = vector.broadcast %5 : vector<1x256xf32> to vector<14x256xf32>
    %7 = arith.addf %4, %6 : vector<14x256xf32>
    %cst_7 = arith.constant 0.000000e+00 : f32
    %8 = vector.broadcast %cst_7 : f32 to vector<14x256xf32>
    %9 = arith.cmpf oge, %7, %8 : vector<14x256xf32>
    %cst_8 = arith.constant 0.00999999977 : f32
    %10 = vector.broadcast %cst_8 : f32 to vector<14x256xf32>
    %11 = arith.mulf %10, %7 : vector<14x256xf32>
    %12 = arith.select %9, %7, %11 : vector<14x256xi1>, vector<14x256xf32>
    %13 = tpu.iota {dimensions = array<i32: 0>} : vector<14x1xi32>
    %c3_i32 = arith.constant 3 : i32
    %14 = arith.subi %0, %c3_i32 : i32
    %15 = vector.broadcast %14 : i32 to vector<14x1xi32>
    %16 = arith.addi %13, %15 : vector<14x1xi32>
    %c0_i32 = arith.constant 0 : i32
    %17 = vector.broadcast %c0_i32 : i32 to vector<14x1xi32>
    %18 = arith.cmpi sge, %16, %17 : vector<14x1xi32>
    %c16_i32 = arith.constant 16 : i32
    %19 = vector.broadcast %c16_i32 : i32 to vector<14x1xi32>
    %20 = arith.cmpi slt, %16, %19 : vector<14x1xi32>
    %21 = arith.andi %18, %20 : vector<14x1xi1>
    %cst_9 = arith.constant 0.000000e+00 : f32
    %22 = vector.shape_cast %21 : vector<14x1xi1> to vector<14x1xi1>
    %23 = vector.broadcast %22 : vector<14x1xi1> to vector<14x256xi1>
    %24 = vector.broadcast %cst_9 : f32 to vector<14x256xf32>
    %25 = arith.select %23, %12, %24 : vector<14x256xi1>, vector<14x256xf32>
    %26 = vector.extract_strided_slice %25 {offsets = [0, 0], sizes = [12, 256], strides = [1, 1]} : vector<14x256xf32> to vector<12x256xf32>
    %c0_10 = arith.constant 0 : index
    %c0_11 = arith.constant 0 : index
    %c0_12 = arith.constant 0 : index
    %27 = vector.load %arg5[%c0_10, %c0_11, %c0_12] : memref<3x256x128xf32, #tpu.memory_space<vmem>>, vector<1x256x128xf32>
    %28 = vector.shape_cast %27 : vector<1x256x128xf32> to vector<256x128xf32>
    %cst_13 = arith.constant dense<0.000000e+00> : vector<12x128xf32>
    %29 = tpu.matmul %26, %28, %cst_13 {dimension_numbers = #tpu.dot_dimension_numbers<[1], [0], [0], [1], [0, 0, 1, 1], [], []>} : vector<12x256xf32>, vector<256x128xf32>, vector<12x128xf32> -> vector<12x128xf32>
    %30 = vector.extract_strided_slice %25 {offsets = [1, 0], sizes = [12, 256], strides = [1, 1]} : vector<14x256xf32> to vector<12x256xf32>
    %c1 = arith.constant 1 : index
    %c0_14 = arith.constant 0 : index
    %c0_15 = arith.constant 0 : index
    %31 = vector.load %arg5[%c1, %c0_14, %c0_15] : memref<3x256x128xf32, #tpu.memory_space<vmem>>, vector<1x256x128xf32>
    %32 = vector.shape_cast %31 : vector<1x256x128xf32> to vector<256x128xf32>
    %cst_16 = arith.constant dense<0.000000e+00> : vector<12x128xf32>
    %33 = tpu.matmul %30, %32, %cst_16 {dimension_numbers = #tpu.dot_dimension_numbers<[1], [0], [0], [1], [0, 0, 1, 1], [], []>} : vector<12x256xf32>, vector<256x128xf32>, vector<12x128xf32> -> vector<12x128xf32>
    %34 = arith.addf %29, %33 : vector<12x128xf32>
    %35 = vector.extract_strided_slice %25 {offsets = [2, 0], sizes = [12, 256], strides = [1, 1]} : vector<14x256xf32> to vector<12x256xf32>
    %c2 = arith.constant 2 : index
    %c0_17 = arith.constant 0 : index
    %c0_18 = arith.constant 0 : index
    %36 = vector.load %arg5[%c2, %c0_17, %c0_18] : memref<3x256x128xf32, #tpu.memory_space<vmem>>, vector<1x256x128xf32>
    %37 = vector.shape_cast %36 : vector<1x256x128xf32> to vector<256x128xf32>
    %cst_19 = arith.constant dense<0.000000e+00> : vector<12x128xf32>
    %38 = tpu.matmul %35, %37, %cst_19 {dimension_numbers = #tpu.dot_dimension_numbers<[1], [0], [0], [1], [0, 0, 1, 1], [], []>} : vector<12x256xf32>, vector<256x128xf32>, vector<12x128xf32> -> vector<12x128xf32>
    %39 = arith.addf %34, %38 : vector<12x128xf32>
    %c0_20 = arith.constant 0 : index
    %c0_21 = arith.constant 0 : index
    %40 = vector.load %arg6[%c0_20, %c0_21] : memref<1x128xf32, #tpu.memory_space<vmem>>, vector<1x128xf32>
    %41 = vector.broadcast %40 : vector<1x128xf32> to vector<12x128xf32>
    %42 = arith.addf %39, %41 : vector<12x128xf32>
    %cst_22 = arith.constant 0.000000e+00 : f32
    %43 = vector.broadcast %cst_22 : f32 to vector<12x128xf32>
    %44 = arith.cmpf oge, %42, %43 : vector<12x128xf32>
    %cst_23 = arith.constant 0.00999999977 : f32
    %45 = vector.broadcast %cst_23 : f32 to vector<12x128xf32>
    %46 = arith.mulf %45, %42 : vector<12x128xf32>
    %47 = arith.select %44, %42, %46 : vector<12x128xi1>, vector<12x128xf32>
    %48 = tpu.iota {dimensions = array<i32: 0>} : vector<12x1xi32>
    %c2_i32 = arith.constant 2 : i32
    %49 = arith.subi %0, %c2_i32 : i32
    %50 = vector.broadcast %49 : i32 to vector<12x1xi32>
    %51 = arith.addi %48, %50 : vector<12x1xi32>
    %c0_i32_24 = arith.constant 0 : i32
    %52 = vector.broadcast %c0_i32_24 : i32 to vector<12x1xi32>
    %53 = arith.cmpi sge, %51, %52 : vector<12x1xi32>
    %c16_i32_25 = arith.constant 16 : i32
    %54 = vector.broadcast %c16_i32_25 : i32 to vector<12x1xi32>
    %55 = arith.cmpi slt, %51, %54 : vector<12x1xi32>
    %56 = arith.andi %53, %55 : vector<12x1xi1>
    %cst_26 = arith.constant 0.000000e+00 : f32
    %57 = vector.shape_cast %56 : vector<12x1xi1> to vector<12x1xi1>
    %58 = vector.broadcast %57 : vector<12x1xi1> to vector<12x128xi1>
    %59 = vector.broadcast %cst_26 : f32 to vector<12x128xf32>
    %60 = arith.select %58, %47, %59 : vector<12x128xi1>, vector<12x128xf32>
    %61 = vector.extract_strided_slice %60 {offsets = [0, 0], sizes = [10, 128], strides = [1, 1]} : vector<12x128xf32> to vector<10x128xf32>
    %c0_27 = arith.constant 0 : index
    %c0_28 = arith.constant 0 : index
    %c0_29 = arith.constant 0 : index
    %62 = vector.load %arg7[%c0_27, %c0_28, %c0_29] : memref<3x128x64xf32, #tpu.memory_space<vmem>>, vector<1x128x64xf32>
    %63 = vector.shape_cast %62 : vector<1x128x64xf32> to vector<128x64xf32>
    %cst_30 = arith.constant dense<0.000000e+00> : vector<10x64xf32>
    %64 = tpu.matmul %61, %63, %cst_30 {dimension_numbers = #tpu.dot_dimension_numbers<[1], [0], [0], [1], [0, 0, 1, 1], [], []>} : vector<10x128xf32>, vector<128x64xf32>, vector<10x64xf32> -> vector<10x64xf32>
    %65 = vector.extract_strided_slice %60 {offsets = [1, 0], sizes = [10, 128], strides = [1, 1]} : vector<12x128xf32> to vector<10x128xf32>
    %c1_31 = arith.constant 1 : index
    %c0_32 = arith.constant 0 : index
    %c0_33 = arith.constant 0 : index
    %66 = vector.load %arg7[%c1_31, %c0_32, %c0_33] : memref<3x128x64xf32, #tpu.memory_space<vmem>>, vector<1x128x64xf32>
    %67 = vector.shape_cast %66 : vector<1x128x64xf32> to vector<128x64xf32>
    %cst_34 = arith.constant dense<0.000000e+00> : vector<10x64xf32>
    %68 = tpu.matmul %65, %67, %cst_34 {dimension_numbers = #tpu.dot_dimension_numbers<[1], [0], [0], [1], [0, 0, 1, 1], [], []>} : vector<10x128xf32>, vector<128x64xf32>, vector<10x64xf32> -> vector<10x64xf32>
    %69 = arith.addf %64, %68 : vector<10x64xf32>
    %70 = vector.extract_strided_slice %60 {offsets = [2, 0], sizes = [10, 128], strides = [1, 1]} : vector<12x128xf32> to vector<10x128xf32>
    %c2_35 = arith.constant 2 : index
    %c0_36 = arith.constant 0 : index
    %c0_37 = arith.constant 0 : index
    %71 = vector.load %arg7[%c2_35, %c0_36, %c0_37] : memref<3x128x64xf32, #tpu.memory_space<vmem>>, vector<1x128x64xf32>
    %72 = vector.shape_cast %71 : vector<1x128x64xf32> to vector<128x64xf32>
    %cst_38 = arith.constant dense<0.000000e+00> : vector<10x64xf32>
    %73 = tpu.matmul %70, %72, %cst_38 {dimension_numbers = #tpu.dot_dimension_numbers<[1], [0], [0], [1], [0, 0, 1, 1], [], []>} : vector<10x128xf32>, vector<128x64xf32>, vector<10x64xf32> -> vector<10x64xf32>
    %74 = arith.addf %69, %73 : vector<10x64xf32>
    %c0_39 = arith.constant 0 : index
    %c0_40 = arith.constant 0 : index
    %75 = vector.load %arg8[%c0_39, %c0_40] : memref<1x64xf32, #tpu.memory_space<vmem>>, vector<1x64xf32>
    %76 = vector.broadcast %75 : vector<1x64xf32> to vector<10x64xf32>
    %77 = arith.addf %74, %76 : vector<10x64xf32>
    %cst_41 = arith.constant 0.000000e+00 : f32
    %78 = vector.broadcast %cst_41 : f32 to vector<10x64xf32>
    %79 = arith.cmpf oge, %77, %78 : vector<10x64xf32>
    %cst_42 = arith.constant 0.00999999977 : f32
    %80 = vector.broadcast %cst_42 : f32 to vector<10x64xf32>
    %81 = arith.mulf %80, %77 : vector<10x64xf32>
    %82 = arith.select %79, %77, %81 : vector<10x64xi1>, vector<10x64xf32>
    %83 = tpu.iota {dimensions = array<i32: 0>} : vector<10x1xi32>
    %c1_i32 = arith.constant 1 : i32
    %84 = arith.subi %0, %c1_i32 : i32
    %85 = vector.broadcast %84 : i32 to vector<10x1xi32>
    %86 = arith.addi %83, %85 : vector<10x1xi32>
    %c0_i32_43 = arith.constant 0 : i32
    %87 = vector.broadcast %c0_i32_43 : i32 to vector<10x1xi32>
    %88 = arith.cmpi sge, %86, %87 : vector<10x1xi32>
    %c16_i32_44 = arith.constant 16 : i32
    %89 = vector.broadcast %c16_i32_44 : i32 to vector<10x1xi32>
    %90 = arith.cmpi slt, %86, %89 : vector<10x1xi32>
    %91 = arith.andi %88, %90 : vector<10x1xi1>
    %cst_45 = arith.constant 0.000000e+00 : f32
    %92 = vector.shape_cast %91 : vector<10x1xi1> to vector<10x1xi1>
    %93 = vector.broadcast %92 : vector<10x1xi1> to vector<10x64xi1>
    %94 = vector.broadcast %cst_45 : f32 to vector<10x64xf32>
    %95 = arith.select %93, %82, %94 : vector<10x64xi1>, vector<10x64xf32>
    %96 = vector.extract_strided_slice %95 {offsets = [0, 0], sizes = [8, 64], strides = [1, 1]} : vector<10x64xf32> to vector<8x64xf32>
    %c0_46 = arith.constant 0 : index
    %c0_47 = arith.constant 0 : index
    %c0_48 = arith.constant 0 : index
    %97 = vector.load %arg9[%c0_46, %c0_47, %c0_48] : memref<3x64x2xf32, #tpu.memory_space<vmem>>, vector<1x64x2xf32>
    %98 = vector.shape_cast %97 : vector<1x64x2xf32> to vector<64x2xf32>
    %cst_49 = arith.constant dense<0.000000e+00> : vector<8x2xf32>
    %99 = tpu.matmul %96, %98, %cst_49 {dimension_numbers = #tpu.dot_dimension_numbers<[1], [0], [0], [1], [0, 0, 1, 1], [], []>} : vector<8x64xf32>, vector<64x2xf32>, vector<8x2xf32> -> vector<8x2xf32>
    %100 = vector.extract_strided_slice %95 {offsets = [1, 0], sizes = [8, 64], strides = [1, 1]} : vector<10x64xf32> to vector<8x64xf32>
    %c1_50 = arith.constant 1 : index
    %c0_51 = arith.constant 0 : index
    %c0_52 = arith.constant 0 : index
    %101 = vector.load %arg9[%c1_50, %c0_51, %c0_52] : memref<3x64x2xf32, #tpu.memory_space<vmem>>, vector<1x64x2xf32>
    %102 = vector.shape_cast %101 : vector<1x64x2xf32> to vector<64x2xf32>
    %cst_53 = arith.constant dense<0.000000e+00> : vector<8x2xf32>
    %103 = tpu.matmul %100, %102, %cst_53 {dimension_numbers = #tpu.dot_dimension_numbers<[1], [0], [0], [1], [0, 0, 1, 1], [], []>} : vector<8x64xf32>, vector<64x2xf32>, vector<8x2xf32> -> vector<8x2xf32>
    %104 = arith.addf %99, %103 : vector<8x2xf32>
    %105 = vector.extract_strided_slice %95 {offsets = [2, 0], sizes = [8, 64], strides = [1, 1]} : vector<10x64xf32> to vector<8x64xf32>
    %c2_54 = arith.constant 2 : index
    %c0_55 = arith.constant 0 : index
    %c0_56 = arith.constant 0 : index
    %106 = vector.load %arg9[%c2_54, %c0_55, %c0_56] : memref<3x64x2xf32, #tpu.memory_space<vmem>>, vector<1x64x2xf32>
    %107 = vector.shape_cast %106 : vector<1x64x2xf32> to vector<64x2xf32>
    %cst_57 = arith.constant dense<0.000000e+00> : vector<8x2xf32>
    %108 = tpu.matmul %105, %107, %cst_57 {dimension_numbers = #tpu.dot_dimension_numbers<[1], [0], [0], [1], [0, 0, 1, 1], [], []>} : vector<8x64xf32>, vector<64x2xf32>, vector<8x2xf32> -> vector<8x2xf32>
    %109 = arith.addf %104, %108 : vector<8x2xf32>
    %c0_58 = arith.constant 0 : index
    %c0_59 = arith.constant 0 : index
    %110 = vector.load %arg10[%c0_58, %c0_59] : memref<1x2xf32, #tpu.memory_space<vmem>>, vector<1x2xf32>
    %111 = vector.broadcast %110 : vector<1x2xf32> to vector<8x2xf32>
    %112 = arith.addf %109, %111 : vector<8x2xf32>
    %c0_60 = arith.constant 0 : index
    %c0_61 = arith.constant 0 : index
    %c0_62 = arith.constant 0 : index
    %c0_63 = arith.constant 0 : index
    %113 = vector.load %arg11[%c0_60, %c0_61, %c0_62, %c0_63] : memref<1x1x8x2xf32, #tpu.memory_space<vmem>>, vector<1x1x8x2xf32>
    %114 = vector.shape_cast %113 : vector<1x1x8x2xf32> to vector<8x2xf32>
    %115 = vector.shape_cast %112 : vector<8x2xf32> to vector<1x1x8x2xf32>
    tpu.vector_store %arg11[%c0_60, %c0_61, %c0_62, %c0_63], %115 {strides = array<i32>} : memref<1x1x8x2xf32, #tpu.memory_space<vmem>>, vector<1x1x8x2xf32>,
    return
  }
  func.func @transform_0(%arg0: i32, %arg1: i32) -> (i32, i32, i32, i32) {
    %c0_i32 = arith.constant 0 : i32
    %c0_i32_0 = arith.constant 0 : i32
    %c0_i32_1 = arith.constant 0 : i32
    return %arg0, %arg1, %c0_i32, %c0_i32_0 : i32, i32, i32, i32
  }
  func.func @transform_1(%arg0: i32, %arg1: i32) -> (i32, i32) {
    %c0_i32 = arith.constant 0 : i32
    %c0_i32_0 = arith.constant 0 : i32
    %c0_i32_1 = arith.constant 0 : i32
    return %c0_i32, %c0_i32_0 : i32, i32
  }
  func.func @transform_2(%arg0: i32, %arg1: i32) -> (i32, i32) {
    %c0_i32 = arith.constant 0 : i32
    %c0_i32_0 = arith.constant 0 : i32
    %c0_i32_1 = arith.constant 0 : i32
    return %c0_i32, %c0_i32_0 : i32, i32
  }
  func.func @transform_3(%arg0: i32, %arg1: i32) -> (i32, i32, i32) {
    %c0_i32 = arith.constant 0 : i32
    %c0_i32_0 = arith.constant 0 : i32
    %c0_i32_1 = arith.constant 0 : i32
    %c0_i32_2 = arith.constant 0 : i32
    return %c0_i32, %c0_i32_0, %c0_i32_1 : i32, i32, i32
  }
  func.func @transform_4(%arg0: i32, %arg1: i32) -> (i32, i32) {
    %c0_i32 = arith.constant 0 : i32
    %c0_i32_0 = arith.constant 0 : i32
    %c0_i32_1 = arith.constant 0 : i32
    return %c0_i32, %c0_i32_0 : i32, i32
  }
  func.func @transform_5(%arg0: i32, %arg1: i32) -> (i32, i32, i32) {
    %c0_i32 = arith.constant 0 : i32
    %c0_i32_0 = arith.constant 0 : i32
    %c0_i32_1 = arith.constant 0 : i32
    %c0_i32_2 = arith.constant 0 : i32
    return %c0_i32, %c0_i32_0, %c0_i32_1 : i32, i32, i32
  }
  func.func @transform_6(%arg0: i32, %arg1: i32) -> (i32, i32) {
    %c0_i32 = arith.constant 0 : i32
    %c0_i32_0 = arith.constant 0 : i32
    %c0_i32_1 = arith.constant 0 : i32
    return %c0_i32, %c0_i32_0 : i32, i32
  }
  func.func @transform_7(%arg0: i32, %arg1: i32) -> (i32, i32, i32) {
    %c0_i32 = arith.constant 0 : i32
    %c0_i32_0 = arith.constant 0 : i32
    %c0_i32_1 = arith.constant 0 : i32
    %c0_i32_2 = arith.constant 0 : i32
    return %c0_i32, %c0_i32_0, %c0_i32_1 : i32, i32, i32
  }
  func.func @transform_8(%arg0: i32, %arg1: i32) -> (i32, i32) {
    %c0_i32 = arith.constant 0 : i32
    %c0_i32_0 = arith.constant 0 : i32
    %c0_i32_1 = arith.constant 0 : i32
    return %c0_i32, %c0_i32_0 : i32, i32
  }
  func.func @transform_9(%arg0: i32, %arg1: i32) -> (i32, i32, i32, i32) {
    %c0_i32 = arith.constant 0 : i32
    %c0_i32_0 = arith.constant 0 : i32
    %c0_i32_1 = arith.constant 0 : i32
    return %arg0, %arg1, %c0_i32, %c0_i32_0 : i32, i32, i32, i32
  }
}

</mosaic_0001>

<llo_original>
// kernel: tpu_custom_call.1
$region0: #{tpu_custom_call.1}
  #allocation0 [shape = 'u32[]', space=smem, size = 0x4, offset = 0x4, fixed_abs, tag = 'smem constant byte address 0x4 - core index']
  #allocation1 [shape = 'u32[72,128]{1,0:T(1,128)}', space=vmem, size = 0x9000, scoped, tag = 'internal scratch']
  %s0 = inlined_call_operand.vmem [shape: f32[2,2,14,120], index: 0, kind: input, shape index: {}]
  %s1 = inlined_call_operand.hbm [shape: f32[120,256], index: 1, kind: input, shape index: {}]
  %s2 = inlined_call_operand.vmem [shape: f32[1,256], index: 2, kind: input, shape index: {}]
  %s3 = inlined_call_operand.vmem [shape: f32[3,256,128], index: 3, kind: input, shape index: {}]
  %s4 = inlined_call_operand.vmem [shape: f32[1,128], index: 4, kind: input, shape index: {}]
  %s5 = inlined_call_operand.vmem [shape: f32[3,128,64], index: 5, kind: input, shape index: {}]
  %s6 = inlined_call_operand.vmem [shape: f32[1,64], index: 6, kind: input, shape index: {}]
  %s7 = inlined_call_operand.vmem [shape: f32[3,64,2], index: 7, kind: input, shape index: {}]
  %s8 = inlined_call_operand.vmem [shape: f32[1,2], index: 8, kind: input, shape index: {}]
  %s9 = inlined_call_operand.vmem [shape: f32[2,2,8,2], index: 9, kind: output, shape index: {}]
  %s10 = sld [smem:[#allocation0]]
  $region73: #{tpu_custom_call.1} parent=0
    _
  %s12 = ssub.s32 1, %s10
  %s13 = scalar_select 0, %s12, %s10
  $region1: #{tpu_custom_call.1} parent=0
    #allocation2 [shape = 'u8[122880]{0}', space=vmem, size = 0x1e000, scoped, tag = 'input window, operand 1, single buffered']
    #allocation3 [shape = 's32[2]{0}', space=sflag, size = 0x8, scoped, tag = 'scoped memory for tpu_custom_call.1']
    %14 = vsyncpa [#allocation3], 0
    loop: start=0, step=1, limit=6
    $region2: #{tpu_custom_call.1} parent=1 // loop_pre_header
      _
    $region3: #{tpu_custom_call.1} parent=1 // loop_header
      %s16 = sphi 0, %s20
      %p17 = scmp.ge.s32.totalorder %s16, 6
      %s23 = sphi 0, %s35
      %s24 = sphi 0, %s31
      %s25 = sphi 0, %s23
      %s26 = sphi 0, %s24
      %s27 = sphi 0, %s25
      %s28 = sphi 0, %s26
      %s40 = sphi 0, %s42
      %s43 = sphi 0, %s40
      %s44 = sphi 0, %s43
      %s60 = sphi 0, %s44
      %s64 = sphi 0, %s64
      %s66 = sphi 0, %s64
      %s67 = sphi 0, %s66
      %s81 = sphi 0, %s67
      %s85 = sphi 0, %s85
      %s87 = sphi 0, %s85
      %s88 = sphi 0, %s87
      %s102 = sphi 0, %s88
      %s106 = sphi 0, %s106
      %s108 = sphi 0, %s106
      %s109 = sphi 0, %s108
      %s123 = sphi 0, %s109
      %s127 = sphi 0, %s127
      %s129 = sphi 0, %s127
      %s130 = sphi 0, %s129
      %s144 = sphi 0, %s130
      %s148 = sphi 0, %s148
      %s150 = sphi 0, %s148
      %s151 = sphi 0, %s150
      %s165 = sphi 0, %s151
      %s169 = sphi 0, %s169
      %s171 = sphi 0, %s169
      %s172 = sphi 0, %s171
      %s186 = sphi 0, %s172
      %s190 = sphi 0, %s190
      %s192 = sphi 0, %s190
      %s193 = sphi 0, %s192
      %s207 = sphi 0, %s193
      %s211 = sphi 0, %s211
      %s213 = sphi 0, %s211
      %s214 = sphi 0, %s213
      %s228 = sphi 0, %s214
      %s236 = sphi 0, %s238
      %s239 = sphi 0, %s236
      %s240 = sphi 0, %s239
      %s256 = sphi 0, %s240
    $region4: #{tpu_custom_call.1} parent=1 // loop_header_branch
      %19 = sbr.rel (%p17) target = $region8
    $region5: #{tpu_custom_call.1} parent=1 // loop_body
      %s21 = ssub.s32 %s16, 1
      %s22 = ssub.s32 %s16, 2
      %s29 = sadd.s32 1, %s24
      %p30 = scmp.ge.s32.totalorder %s29, 2
      %s31 = scalar_select %p30, 0, %s29
      %s32 = sadd.s32 1, %s23
      %s33 = scalar_select %p30, %s32, %s23
      %p34 = scmp.ge.s32.totalorder %s33, 2
      %s35 = scalar_select %p34, 0, %s33
      %s36 = ssub.s32 %s23, %s35
      %s37 = ssub.s32 %s24, %s31
      %s38 = sor.u32 %s36, %s37
      %p39 = scmp.eq.s32.totalorder %s38, 0
      %s41 = sadd.s32 %s40, 1
      %s42 = scalar_select %p39, %s40, %s41
      %p45 = pneg %p39
      %p46 = scmp.eq.s32.totalorder %s16, 3
      %p47 = por %p45, %p46
      %p48 = scmp.ne.s32.totalorder %s40, %s43
      %p49 = scmp.eq.s32.totalorder %s16, 0
      %p50 = por %p48, %p49
      %p51 = scmp.ne.s32.totalorder %s40, %s43
      %p52 = scmp.eq.s32.totalorder %s21, 3
      %p53 = por %p51, %p52
      %p54 = scmp.ne.s32.totalorder %s43, %s44
      %p55 = scmp.eq.s32.totalorder %s21, 0
      %p56 = por %p54, %p55
      %p57 = scmp.ne.s32.totalorder %s43, %s44
      %p58 = scmp.eq.s32.totalorder %s22, 3
      %p59 = por %p57, %p58
      %p61 = scmp.ne.s32.totalorder %s44, %s60
      %p62 = scmp.eq.s32.totalorder %s22, 0
      %p63 = por %p61, %p62
      %s65 = sadd.s32 %s64, 1
      %p68 = scmp.eq.s32.totalorder %s16, 3
      %p69 = scmp.ne.s32.totalorder %s64, %s66
      %p70 = scmp.eq.s32.totalorder %s16, 0
      %p71 = por %p69, %p70
      %p72 = scmp.ne.s32.totalorder %s64, %s66
      %p73 = scmp.eq.s32.totalorder %s21, 3
      %p74 = por %p72, %p73
      %p75 = scmp.ne.s32.totalorder %s66, %s67
      %p76 = scmp.eq.s32.totalorder %s21, 0
      %p77 = por %p75, %p76
      %p78 = scmp.ne.s32.totalorder %s66, %s67
      %p79 = scmp.eq.s32.totalorder %s22, 3
      %p80 = por %p78, %p79
      %p82 = scmp.ne.s32.totalorder %s67, %s81
      %p83 = scmp.eq.s32.totalorder %s22, 0
      %p84 = por %p82, %p83
      %s86 = sadd.s32 %s85, 1
      %p89 = scmp.eq.s32.totalorder %s16, 3
      %p90 = scmp.ne.s32.totalorder %s85, %s87
      %p91 = scmp.eq.s32.totalorder %s16, 0
      %p92 = por %p90, %p91
      %p93 = scmp.ne.s32.totalorder %s85, %s87
      %p94 = scmp.eq.s32.totalorder %s21, 3
      %p95 = por %p93, %p94
      %p96 = scmp.ne.s32.totalorder %s87, %s88
      %p97 = scmp.eq.s32.totalorder %s21, 0
      %p98 = por %p96, %p97
      %p99 = scmp.ne.s32.totalorder %s87, %s88
      %p100 = scmp.eq.s32.totalorder %s22, 3
      %p101 = por %p99, %p100
      %p103 = scmp.ne.s32.totalorder %s88, %s102
      %p104 = scmp.eq.s32.totalorder %s22, 0
      %p105 = por %p103, %p104
      %s107 = sadd.s32 %s106, 1
      %p110 = scmp.eq.s32.totalorder %s16, 3
      %p111 = scmp.ne.s32.totalorder %s106, %s108
      %p112 = scmp.eq.s32.totalorder %s16, 0
      %p113 = por %p111, %p112
      %p114 = scmp.ne.s32.totalorder %s106, %s108
      %p115 = scmp.eq.s32.totalorder %s21, 3
      %p116 = por %p114, %p115
      %p117 = scmp.ne.s32.totalorder %s108, %s109
      %p118 = scmp.eq.s32.totalorder %s21, 0
      %p119 = por %p117, %p118
      %p120 = scmp.ne.s32.totalorder %s108, %s109
      %p121 = scmp.eq.s32.totalorder %s22, 3
      %p122 = por %p120, %p121
      %p124 = scmp.ne.s32.totalorder %s109, %s123
      %p125 = scmp.eq.s32.totalorder %s22, 0
      %p126 = por %p124, %p125
      %s128 = sadd.s32 %s127, 1
      %p131 = scmp.eq.s32.totalorder %s16, 3
      %p132 = scmp.ne.s32.totalorder %s127, %s129
      %p133 = scmp.eq.s32.totalorder %s16, 0
      %p134 = por %p132, %p133
      %p135 = scmp.ne.s32.totalorder %s127, %s129
      %p136 = scmp.eq.s32.totalorder %s21, 3
      %p137 = por %p135, %p136
      %p138 = scmp.ne.s32.totalorder %s129, %s130
      %p139 = scmp.eq.s32.totalorder %s21, 0
      %p140 = por %p138, %p139
      %p141 = scmp.ne.s32.totalorder %s129, %s130
      %p142 = scmp.eq.s32.totalorder %s22, 3
      %p143 = por %p141, %p142
      %p145 = scmp.ne.s32.totalorder %s130, %s144
      %p146 = scmp.eq.s32.totalorder %s22, 0
      %p147 = por %p145, %p146
      %s149 = sadd.s32 %s148, 1
      %p152 = scmp.eq.s32.totalorder %s16, 3
      %p153 = scmp.ne.s32.totalorder %s148, %s150
      %p154 = scmp.eq.s32.totalorder %s16, 0
      %p155 = por %p153, %p154
      %p156 = scmp.ne.s32.totalorder %s148, %s150
      %p157 = scmp.eq.s32.totalorder %s21, 3
      %p158 = por %p156, %p157
      %p159 = scmp.ne.s32.totalorder %s150, %s151
      %p160 = scmp.eq.s32.totalorder %s21, 0
      %p161 = por %p159, %p160
      %p162 = scmp.ne.s32.totalorder %s150, %s151
      %p163 = scmp.eq.s32.totalorder %s22, 3
      %p164 = por %p162, %p163
      %p166 = scmp.ne.s32.totalorder %s151, %s165
      %p167 = scmp.eq.s32.totalorder %s22, 0
      %p168 = por %p166, %p167
      %s170 = sadd.s32 %s169, 1
      %p173 = scmp.eq.s32.totalorder %s16, 3
      %p174 = scmp.ne.s32.totalorder %s169, %s171
      %p175 = scmp.eq.s32.totalorder %s16, 0
      %p176 = por %p174, %p175
      %p177 = scmp.ne.s32.totalorder %s169, %s171
      %p178 = scmp.eq.s32.totalorder %s21, 3
      %p179 = por %p177, %p178
      %p180 = scmp.ne.s32.totalorder %s171, %s172
      %p181 = scmp.eq.s32.totalorder %s21, 0
      %p182 = por %p180, %p181
      %p183 = scmp.ne.s32.totalorder %s171, %s172
      %p184 = scmp.eq.s32.totalorder %s22, 3
      %p185 = por %p183, %p184
      %p187 = scmp.ne.s32.totalorder %s172, %s186
      %p188 = scmp.eq.s32.totalorder %s22, 0
      %p189 = por %p187, %p188
      %s191 = sadd.s32 %s190, 1
      %p194 = scmp.eq.s32.totalorder %s16, 3
      %p195 = scmp.ne.s32.totalorder %s190, %s192
      %p196 = scmp.eq.s32.totalorder %s16, 0
      %p197 = por %p195, %p196
      %p198 = scmp.ne.s32.totalorder %s190, %s192
      %p199 = scmp.eq.s32.totalorder %s21, 3
      %p200 = por %p198, %p199
      %p201 = scmp.ne.s32.totalorder %s192, %s193
      %p202 = scmp.eq.s32.totalorder %s21, 0
      %p203 = por %p201, %p202
      %p204 = scmp.ne.s32.totalorder %s192, %s193
      %p205 = scmp.eq.s32.totalorder %s22, 3
      %p206 = por %p204, %p205
      %p208 = scmp.ne.s32.totalorder %s193, %s207
      %p209 = scmp.eq.s32.totalorder %s22, 0
      %p210 = por %p208, %p209
      %s212 = sadd.s32 %s211, 1
      %p215 = scmp.eq.s32.totalorder %s16, 3
      %p216 = scmp.ne.s32.totalorder %s211, %s213
      %p217 = scmp.eq.s32.totalorder %s16, 0
      %p218 = por %p216, %p217
      %p219 = scmp.ne.s32.totalorder %s211, %s213
      %p220 = scmp.eq.s32.totalorder %s21, 3
      %p221 = por %p219, %p220
      %p222 = scmp.ne.s32.totalorder %s213, %s214
      %p223 = scmp.eq.s32.totalorder %s21, 0
      %p224 = por %p222, %p223
      %p225 = scmp.ne.s32.totalorder %s213, %s214
      %p226 = scmp.eq.s32.totalorder %s22, 3
      %p227 = por %p225, %p226
      %p229 = scmp.ne.s32.totalorder %s214, %s228
      %p230 = scmp.eq.s32.totalorder %s22, 0
      %p231 = por %p229, %p230
      %s232 = ssub.s32 %s23, %s35
      %s233 = ssub.s32 %s24, %s31
      %s234 = sor.u32 %s232, %s233
      %p235 = scmp.eq.s32.totalorder %s234, 0
      %s237 = sadd.s32 %s236, 1
      %s238 = scalar_select %p235, %s236, %s237
      %p241 = pneg %p235
      %p242 = scmp.eq.s32.totalorder %s16, 3
      %p243 = por %p241, %p242
      %p244 = scmp.ne.s32.totalorder %s236, %s239
      %p245 = scmp.eq.s32.totalorder %s16, 0
      %p246 = por %p244, %p245
      %p247 = scmp.ne.s32.totalorder %s236, %s239
      %p248 = scmp.eq.s32.totalorder %s21, 3
      %p249 = por %p247, %p248
      %p250 = scmp.ne.s32.totalorder %s239, %s240
      %p251 = scmp.eq.s32.totalorder %s21, 0
      %p252 = por %p250, %p251
      %p253 = scmp.ne.s32.totalorder %s239, %s240
      %p254 = scmp.eq.s32.totalorder %s22, 3
      %p255 = por %p253, %p254
      %p257 = scmp.ne.s32.totalorder %s240, %s256
      %p258 = scmp.eq.s32.totalorder %s22, 0
      %p259 = por %p257, %p258
      %p260 = scmp.le.s32.totalorder 1, %s16
      %p261 = scmp.lt.s32.totalorder %s16, 5
      %p262 = pnand %p260, %p261
      %p263 = pneg %p262
      // Predicated region
      $region9: #{tpu_custom_call.1} parent=5 // pred_check
        _
      $region10: #{tpu_custom_call.1} parent=5 // pred_check_branch
        %265 = sbr.rel (%p262) target = $region12
      $region11: #{tpu_custom_call.1} parent=5 // pred_region
        %s266 = ssub.s32 %s16, 1
        // Predicated region
        $region13: #{tpu_custom_call.1} parent=11 // pred_check
          %p267 = pneg %p77
        $region14: #{tpu_custom_call.1} parent=11 // pred_check_branch
          %269 = sbr.rel (%p267) target = $region16
        $region15: #{tpu_custom_call.1} parent=11 // pred_region
          %271 = vsyncadd [#allocation3], 0
          %s272 = sshll.u32 %s1, 4
          %s273 = int_to_ptr.hbm [resolvable:$true] %s272
          %s274 = sshll.u32 [#allocation2], 4
          %s275 = int_to_ptr.vmem [resolvable:$true] %s274
          %280 = dma.hbm_to_vmem [thread:$0]  %s273, 3840, %s275, [#allocation3], 256, 256, 16
        $region16: #{tpu_custom_call.1} parent=11 // pred_fallthru
          _
        // Predicated region
        $region17: #{tpu_custom_call.1} parent=11 // pred_check
          %p281 = pneg %p98
        $region18: #{tpu_custom_call.1} parent=11 // pred_check_branch
          %283 = sbr.rel (%p281) target = $region20
        $region19: #{tpu_custom_call.1} parent=11 // pred_region
          _
        $region20: #{tpu_custom_call.1} parent=11 // pred_fallthru
          _
        // Predicated region
        $region21: #{tpu_custom_call.1} parent=11 // pred_check
          %p284 = pneg %p119
        $region22: #{tpu_custom_call.1} parent=11 // pred_check_branch
          %286 = sbr.rel (%p284) target = $region24
        $region23: #{tpu_custom_call.1} parent=11 // pred_region
          _
        $region24: #{tpu_custom_call.1} parent=11 // pred_fallthru
          _
        // Predicated region
        $region25: #{tpu_custom_call.1} parent=11 // pred_check
          %p287 = pneg %p140
        $region26: #{tpu_custom_call.1} parent=11 // pred_check_branch
          %289 = sbr.rel (%p287) target = $region28
        $region27: #{tpu_custom_call.1} parent=11 // pred_region
          _
        $region28: #{tpu_custom_call.1} parent=11 // pred_fallthru
          _
        // Predicated region
        $region29: #{tpu_custom_call.1} parent=11 // pred_check
          %p290 = pneg %p161
        $region30: #{tpu_custom_call.1} parent=11 // pred_check_branch
          %292 = sbr.rel (%p290) target = $region32
        $region31: #{tpu_custom_call.1} parent=11 // pred_region
          _
        $region32: #{tpu_custom_call.1} parent=11 // pred_fallthru
          _
        // Predicated region
        $region33: #{tpu_custom_call.1} parent=11 // pred_check
          %p293 = pneg %p182
        $region34: #{tpu_custom_call.1} parent=11 // pred_check_branch
          %295 = sbr.rel (%p293) target = $region36
        $region35: #{tpu_custom_call.1} parent=11 // pred_region
          _
        $region36: #{tpu_custom_call.1} parent=11 // pred_fallthru
          _
        // Predicated region
        $region37: #{tpu_custom_call.1} parent=11 // pred_check
          %p296 = pneg %p203
        $region38: #{tpu_custom_call.1} parent=11 // pred_check_branch
          %298 = sbr.rel (%p296) target = $region40
        $region39: #{tpu_custom_call.1} parent=11 // pred_region
          _
        $region40: #{tpu_custom_call.1} parent=11 // pred_fallthru
          _
        // Predicated region
        $region41: #{tpu_custom_call.1} parent=11 // pred_check
          %p299 = pneg %p224
        $region42: #{tpu_custom_call.1} parent=11 // pred_check_branch
          %301 = sbr.rel (%p299) target = $region44
        $region43: #{tpu_custom_call.1} parent=11 // pred_region
          _
        $region44: #{tpu_custom_call.1} parent=11 // pred_fallthru
          _
      $region12: #{tpu_custom_call.1} parent=5 // pred_fallthru
        _
      %p302 = scmp.lt.s32.totalorder %s16, 4
      // Predicated region
      $region45: #{tpu_custom_call.1} parent=5 // pred_check
        %p303 = pneg %p302
      $region46: #{tpu_custom_call.1} parent=5 // pred_check_branch
        %305 = sbr.rel (%p303) target = $region48
      $region47: #{tpu_custom_call.1} parent=5 // pred_region
        // Predicated region
        $region49: #{tpu_custom_call.1} parent=47 // pred_check
          %p306 = pneg %p50
        $region50: #{tpu_custom_call.1} parent=47 // pred_check_branch
          %308 = sbr.rel (%p306) target = $region52
        $region51: #{tpu_custom_call.1} parent=47 // pred_region
          %p309 = scmp.lt.s32.totalorder %s23, 1
          %s310 = scalar_select %p309, %s23, 1
          %p311 = scmp.lt.s32.totalorder %s24, 1
          %s312 = scalar_select %p311, %s24, 1
          %s313 = smul.addr %s312, 2
          %s314 = smul.addr %s310, 4
          %s315 = sadd.s32 %s313, %s314
          %s316 = smul.addr %s315, 8
          %s317 = scalar_lea.vmem %s0, %s316
        $region52: #{tpu_custom_call.1} parent=47 // pred_fallthru
          _
      $region48: #{tpu_custom_call.1} parent=5 // pred_fallthru
        _
      %p318 = scmp.le.s32.totalorder 1, %s16
      %p319 = scmp.lt.s32.totalorder %s16, 5
      %p320 = pnand %p318, %p319
      %p321 = pneg %p320
      // Predicated region
      $region53: #{tpu_custom_call.1} parent=5 // pred_check
        _
      $region54: #{tpu_custom_call.1} parent=5 // pred_check_branch
        %323 = sbr.rel (%p320) target = $region56
      $region55: #{tpu_custom_call.1} parent=5 // pred_region
        %s324 = ssub.s32 %s16, 1
        // Predicated region
        $region57: #{tpu_custom_call.1} parent=55 // pred_check
          %p325 = pneg %p77
        $region58: #{tpu_custom_call.1} parent=55 // pred_check_branch
          %327 = sbr.rel (%p325) target = $region60
        $region59: #{tpu_custom_call.1} parent=55 // pred_region
          %329 = dma.done [#allocation3], 3840
        $region60: #{tpu_custom_call.1} parent=55 // pred_fallthru
          _
        %p330 = scmp.lt.s32.totalorder %s25, 1
        %s331 = scalar_select %p330, %s25, 1
        %p332 = scmp.lt.s32.totalorder %s26, 1
        %s333 = scalar_select %p332, %s26, 1
        %s334 = smul.addr %s333, 2
        %s335 = smul.addr %s331, 4
        %s336 = sadd.s32 %s334, %s335
        %s337 = smul.addr %s336, 8
        %s338 = scalar_lea.vmem %s0, %s337
        %p339 = pneg %p56
        %p340 = pneg %p53
        %p341 = pneg %p77
        %p342 = pneg %p74
        %p343 = pneg %p98
        %p344 = pneg %p95
        %p345 = pneg %p119
        %p346 = pneg %p116
        %p347 = pneg %p140
        %p348 = pneg %p137
        %p349 = pneg %p161
        %p350 = pneg %p158
        %p351 = pneg %p182
        %p352 = pneg %p179
        %p353 = pneg %p203
        %p354 = pneg %p200
        %p355 = pneg %p224
        %p356 = pneg %p221
        %p357 = pneg %p252
        %p358 = pneg %p249
        %p359 = scmp.lt.s32.totalorder %s25, 1
        %s360 = scalar_select %p359, %s25, 1
        %p361 = scmp.lt.s32.totalorder %s26, 1
        %s362 = scalar_select %p361, %s26, 1
        %s363 = smul.addr %s360, 2
        %s364 = sadd.s32 %s362, %s363
        %s365 = smul.addr %s364, 8
        %s366 = scalar_lea.vmem %s9, %s365
        %p367 = scmp.lt.s32.totalorder %s25, 1
        %s368 = scalar_select %p367, %s25, 1
        %p369 = scmp.lt.s32.totalorder %s26, 1
        %s370 = scalar_select %p369, %s26, 1
        %s371 = smul.addr %s370, 2
        %s372 = smul.addr %s368, 4
        %s373 = sadd.s32 %s371, %s372
        %s374 = smul.addr %s373, 8
        %s375 = scalar_lea.vmem %s0, %s374
        %p376 = scmp.lt.s32.totalorder %s25, 1
        %s377 = scalar_select %p376, %s25, 1
        %p378 = scmp.lt.s32.totalorder %s26, 1
        %s379 = scalar_select %p378, %s26, 1
        %s380 = smul.addr %s377, 2
        %s381 = sadd.s32 %s379, %s380
        %s382 = smul.addr %s381, 8
        %s383 = scalar_lea.vmem %s9, %s382
        %s384 = smul.u32 %s26, 8
        %v385 = vld [vmem:[%s375] sm:$0xff]
        %v386 = vld [vmem:[%s375 + $0x8] sm:$0x3f]
        %v387 = vld [vmem:[#allocation2] sm:$0xff]
        %v388 = vld [vmem:[#allocation2 + $0x8] sm:$0xff]
        %v389 = vld [vmem:[#allocation2 + $0x10] sm:$0xff]
        %v390 = vld [vmem:[#allocation2 + $0x18] sm:$0xff]
        %v391 = vld [vmem:[#allocation2 + $0x20] sm:$0xff]
        %v392 = vld [vmem:[#allocation2 + $0x28] sm:$0xff]
        %v393 = vld [vmem:[#allocation2 + $0x30] sm:$0xff]
        %v394 = vld [vmem:[#allocation2 + $0x38] sm:$0xff]
        %v395 = vld [vmem:[#allocation2 + $0x40] sm:$0xff]
        %v396 = vld [vmem:[#allocation2 + $0x48] sm:$0xff]
        %v397 = vld [vmem:[#allocation2 + $0x50] sm:$0xff]
        %v398 = vld [vmem:[#allocation2 + $0x58] sm:$0xff]
        %v399 = vld [vmem:[#allocation2 + $0x60] sm:$0xff]
        %v400 = vld [vmem:[#allocation2 + $0x68] sm:$0xff]
        %v401 = vld [vmem:[#allocation2 + $0x70] sm:$0xff]
        %v402 = vld [vmem:[#allocation2 + $0x78] sm:$0xff]
        %v403 = vld [vmem:[#allocation2 + $0x80] sm:$0xff]
        %v404 = vld [vmem:[#allocation2 + $0x88] sm:$0xff]
        %v405 = vld [vmem:[#allocation2 + $0x90] sm:$0xff]
        %v406 = vld [vmem:[#allocation2 + $0x98] sm:$0xff]
        %v407 = vld [vmem:[#allocation2 + $0xa0] sm:$0xff]
        %v408 = vld [vmem:[#allocation2 + $0xa8] sm:$0xff]
        %v409 = vld [vmem:[#allocation2 + $0xb0] sm:$0xff]
        %v410 = vld [vmem:[#allocation2 + $0xb8] sm:$0xff]
        %v411 = vld [vmem:[#allocation2 + $0xc0] sm:$0xff]
        %v412 = vld [vmem:[#allocation2 + $0xc8] sm:$0xff]
        %v413 = vld [vmem:[#allocation2 + $0xd0] sm:$0xff]
        %v414 = vld [vmem:[#allocation2 + $0xd8] sm:$0xff]
        %v415 = vld [vmem:[#allocation2 + $0xe0] sm:$0xff]
        %v416 = vld [vmem:[#allocation2 + $0xe8] sm:$0xff]
        %v417 = vld [vmem:[%s2] sm:$0x3]
        %v419 = vperm.slane %v417, 0
        %v420 = vperm.slane %v417, 1
        %vm423 = vcmask 982016
        %v425 = vsel %vm423, %v385, 0
        %v428 = vsel %vm423, %v386, 0
        %430 = vmatpush.msra.mxu0 0.0
        %431 = vmatpush.msra.mxu0 %v415
        %432 = vmatpush.msra.mxu0 %v413
        %433 = vmatpush.msra.mxu0 %v411
        %434 = vmatpush.msra.mxu0 %v409
        %435 = vmatpush.msra.mxu0 %v407
        %436 = vmatpush.msra.mxu0 %v405
        %437 = vmatpush.msra.mxu0 %v403
        %438 = vmatpush.msra.mxu0 %v401
        %439 = vmatpush.msra.mxu0 %v399
        %440 = vmatpush.msra.mxu0 %v397
        %441 = vmatpush.msra.mxu0 %v395
        %442 = vmatpush.msra.mxu0 %v393
        %443 = vmatpush.msra.mxu0 %v391
        %444 = vmatpush.msra.mxu0 %v389
        %445 = vmatpush.msra.mxu0 %v387
        %446 = vmatmul.f32.gmra.mxu0 %v425
        %v447 = vpop.f32.mrf.mxu0
        %v448 = vadd.f32 %v419, %v447
        %449 = vmatmul.f32.gmra.mxu0 %v428
        %v450 = vpop.f32.mrf.mxu0
        %v451 = vadd.f32 %v419, %v450
        %452 = vdwg.mxu0
        %453 = vmatpush.msra.mxu0 0.0
        %454 = vmatpush.msra.mxu0 %v416
        %455 = vmatpush.msra.mxu0 %v414
        %456 = vmatpush.msra.mxu0 %v412
        %457 = vmatpush.msra.mxu0 %v410
        %458 = vmatpush.msra.mxu0 %v408
        %459 = vmatpush.msra.mxu0 %v406
        %460 = vmatpush.msra.mxu0 %v404
        %461 = vmatpush.msra.mxu0 %v402
        %462 = vmatpush.msra.mxu0 %v400
        %463 = vmatpush.msra.mxu0 %v398
        %464 = vmatpush.msra.mxu0 %v396
        %465 = vmatpush.msra.mxu0 %v394
        %466 = vmatpush.msra.mxu0 %v392
        %467 = vmatpush.msra.mxu0 %v390
        %468 = vmatpush.msra.mxu0 %v388
        %469 = vmatmul.f32.gmra.mxu0 %v425
        %v470 = vpop.f32.mrf.mxu0
        %v471 = vadd.f32 %v420, %v470
        %472 = vmatmul.f32.gmra.mxu0 %v428
        %v473 = vpop.f32.mrf.mxu0
        %v474 = vadd.f32 %v420, %v473
        %475 = vdwg.mxu0
        %vm476 = vcmp.ge.f32.partialorder %v448, 0.0
        %vm477 = vcmp.ge.f32.partialorder %v471, 0.0
        %vm478 = vcmp.ge.f32.partialorder %v451, 0.0
        %vm479 = vcmp.ge.f32.partialorder %v474, 0.0
        %v480 = vmul.f32 %v448, 0.01
        %v481 = vmul.f32 %v471, 0.01
        %v482 = vmul.f32 %v451, 0.01
        %v483 = vmul.f32 %v474, 0.01
        %v484 = vsel %vm476, %v448, %v480
        %v485 = vsel %vm477, %v471, %v481
        %v486 = vsel %vm478, %v451, %v482
        %v487 = vsel %vm479, %v474, %v483
        %v488 = vlaneseq
        %v489 = vshrl.u32 %v488, 7
        %v490 = vadd.s32 %v489, 8
        %s491 = ssub.s32 %s384, 3
        %v492 = vstv %s491
        %v493 = vadd.s32 %v489, %v492
        %v494 = vadd.s32 %v490, %v492
        %vm495 = vcmp.ge.s32.totalorder %v493, 0
        %vm496 = vcmp.ge.s32.totalorder %v494, 0
        %vm497 = vcmp.lt.s32.totalorder %v493, 16
        %vm498 = vcmp.lt.s32.totalorder %v494, 16
        %vm499 = vmand %vm495, %vm497
        %vm500 = vmand %vm496, %vm498
        %v501 = vsel %vm499, 1, 0
        %v502 = vsel %vm500, 1, 0
        %vm503 = vcmp.eq.s32.totalorder %v501, 1
        %vm504 = vcmp.eq.s32.totalorder %v502, 1
        %v505 = vsel %vm503, %v484, 0.0
        %v506 = vsel %vm503, %v485, 0.0
        %v507 = vsel %vm504, %v486, 0.0
        %v508 = vsel %vm504, %v487, 0.0
        %v509 = vld [vmem:[%s3] sm:$0xff]
        %v510 = vld [vmem:[%s3 + $0x8] sm:$0xff]
        %v511 = vld [vmem:[%s3 + $0x10] sm:$0xff]
        %v512 = vld [vmem:[%s3 + $0x18] sm:$0xff]
        %v513 = vld [vmem:[%s3 + $0x20] sm:$0xff]
        %v514 = vld [vmem:[%s3 + $0x28] sm:$0xff]
        %v515 = vld [vmem:[%s3 + $0x30] sm:$0xff]
        %v516 = vld [vmem:[%s3 + $0x38] sm:$0xff]
        %v517 = vld [vmem:[%s3 + $0x40] sm:$0xff]
        %v518 = vld [vmem:[%s3 + $0x48] sm:$0xff]
        %v519 = vld [vmem:[%s3 + $0x50] sm:$0xff]
        %v520 = vld [vmem:[%s3 + $0x58] sm:$0xff]
        %v521 = vld [vmem:[%s3 + $0x60] sm:$0xff]
        %v522 = vld [vmem:[%s3 + $0x68] sm:$0xff]
        %v523 = vld [vmem:[%s3 + $0x70] sm:$0xff]
        %v524 = vld [vmem:[%s3 + $0x78] sm:$0xff]
        %v525 = vld [vmem:[%s3 + $0x80] sm:$0xff]
        %v526 = vld [vmem:[%s3 + $0x88] sm:$0xff]
        %v527 = vld [vmem:[%s3 + $0x90] sm:$0xff]
        %v528 = vld [vmem:[%s3 + $0x98] sm:$0xff]
        %v529 = vld [vmem:[%s3 + $0xa0] sm:$0xff]
        %v530 = vld [vmem:[%s3 + $0xa8] sm:$0xff]
        %v531 = vld [vmem:[%s3 + $0xb0] sm:$0xff]
        %v532 = vld [vmem:[%s3 + $0xb8] sm:$0xff]
        %v533 = vld [vmem:[%s3 + $0xc0] sm:$0xff]
        %v534 = vld [vmem:[%s3 + $0xc8] sm:$0xff]
        %v535 = vld [vmem:[%s3 + $0xd0] sm:$0xff]
        %v536 = vld [vmem:[%s3 + $0xd8] sm:$0xff]
        %v537 = vld [vmem:[%s3 + $0xe0] sm:$0xff]
        %v538 = vld [vmem:[%s3 + $0xe8] sm:$0xff]
        %v539 = vld [vmem:[%s3 + $0xf0] sm:$0xff]
        %v540 = vld [vmem:[%s3 + $0xf8] sm:$0xff]
        %s541 = scalar_lea.vmem %s3, 256
        %v542 = vld [vmem:[%s541] sm:$0xff]
        %v543 = vld [vmem:[%s541 + $0x8] sm:$0xff]
        %v544 = vld [vmem:[%s541 + $0x10] sm:$0xff]
        %v545 = vld [vmem:[%s541 + $0x18] sm:$0xff]
        %v546 = vld [vmem:[%s541 + $0x20] sm:$0xff]
        %v547 = vld [vmem:[%s541 + $0x28] sm:$0xff]
        %v548 = vld [vmem:[%s541 + $0x30] sm:$0xff]
        %v549 = vld [vmem:[%s541 + $0x38] sm:$0xff]
        %v550 = vld [vmem:[%s541 + $0x40] sm:$0xff]
        %v551 = vld [vmem:[%s541 + $0x48] sm:$0xff]
        %v552 = vld [vmem:[%s541 + $0x50] sm:$0xff]
        %v553 = vld [vmem:[%s541 + $0x58] sm:$0xff]
        %v554 = vld [vmem:[%s541 + $0x60] sm:$0xff]
        %v555 = vld [vmem:[%s541 + $0x68] sm:$0xff]
        %v556 = vld [vmem:[%s541 + $0x70] sm:$0xff]
        %v557 = vld [vmem:[%s541 + $0x78] sm:$0xff]
        %v558 = vld [vmem:[%s541 + $0x80] sm:$0xff]
        %v559 = vld [vmem:[%s541 + $0x88] sm:$0xff]
        %v560 = vld [vmem:[%s541 + $0x90] sm:$0xff]
        %v561 = vld [vmem:[%s541 + $0x98] sm:$0xff]
        %v562 = vld [vmem:[%s541 + $0xa0] sm:$0xff]
        %v563 = vld [vmem:[%s541 + $0xa8] sm:$0xff]
        %v564 = vld [vmem:[%s541 + $0xb0] sm:$0xff]
        %v565 = vld [vmem:[%s541 + $0xb8] sm:$0xff]
        %v566 = vld [vmem:[%s541 + $0xc0] sm:$0xff]
        %v567 = vld [vmem:[%s541 + $0xc8] sm:$0xff]
        %v568 = vld [vmem:[%s541 + $0xd0] sm:$0xff]
        %v569 = vld [vmem:[%s541 + $0xd8] sm:$0xff]
        %v570 = vld [vmem:[%s541 + $0xe0] sm:$0xff]
        %v571 = vld [vmem:[%s541 + $0xe8] sm:$0xff]
        %v572 = vld [vmem:[%s541 + $0xf0] sm:$0xff]
        %v573 = vld [vmem:[%s541 + $0xf8] sm:$0xff]
        %vm578 = vcmask 1046528
        %v579 = vrot.slane %v505, 1
        %v580 = vrot.slane %v507, 1
        %v581 = vsel %vm578, %v579, %v580
        %v582 = vrot.slane %v506, 1
        %v583 = vrot.slane %v508, 1
        %v584 = vsel %vm578, %v582, %v583
        %589 = vmatpush.msra.mxu0 %v557
        %590 = vmatpush.msra.mxu0 %v556
        %591 = vmatpush.msra.mxu0 %v555
        %592 = vmatpush.msra.mxu0 %v554
        %593 = vmatpush.msra.mxu0 %v553
        %594 = vmatpush.msra.mxu0 %v552
        %595 = vmatpush.msra.mxu0 %v551
        %596 = vmatpush.msra.mxu0 %v550
        %597 = vmatpush.msra.mxu0 %v549
        %598 = vmatpush.msra.mxu0 %v548
        %599 = vmatpush.msra.mxu0 %v547
        %600 = vmatpush.msra.mxu0 %v546
        %601 = vmatpush.msra.mxu0 %v545
        %602 = vmatpush.msra.mxu0 %v544
        %603 = vmatpush.msra.mxu0 %v543
        %604 = vmatpush.msra.mxu0 %v542
        %605 = vmatmul.f32.gmra.mxu0 %v581
        %v606 = vpop.f32.mrf.mxu0
        %v607 = vadd.f32 0.0, %v606
        %608 = vmatmul.f32.gmra.mxu0 %v580
        %v609 = vpop.f32.mrf.mxu0
        %v610 = vadd.f32 0.0, %v609
        %611 = vdwg.mxu0
        %612 = vmatpush.msra.mxu0 %v573
        %613 = vmatpush.msra.mxu0 %v572
        %614 = vmatpush.msra.mxu0 %v571
        %615 = vmatpush.msra.mxu0 %v570
        %616 = vmatpush.msra.mxu0 %v569
        %617 = vmatpush.msra.mxu0 %v568
        %618 = vmatpush.msra.mxu0 %v567
        %619 = vmatpush.msra.mxu0 %v566
        %620 = vmatpush.msra.mxu0 %v565
        %621 = vmatpush.msra.mxu0 %v564
        %622 = vmatpush.msra.mxu0 %v563
        %623 = vmatpush.msra.mxu0 %v562
        %624 = vmatpush.msra.mxu0 %v561
        %625 = vmatpush.msra.mxu0 %v560
        %626 = vmatpush.msra.mxu0 %v559
        %627 = vmatpush.msra.mxu0 %v558
        %628 = vmatmul.f32.gmra.mxu0 %v584
        %v629 = vpop.f32.mrf.mxu0
        %v630 = vadd.f32 %v607, %v629
        %631 = vmatmul.f32.gmra.mxu0 %v583
        %v632 = vpop.f32.mrf.mxu0
        %v633 = vadd.f32 %v610, %v632
        %634 = vdwg.mxu0
        %635 = vmatpush.msra.mxu0 %v524
        %636 = vmatpush.msra.mxu0 %v523
        %637 = vmatpush.msra.mxu0 %v522
        %638 = vmatpush.msra.mxu0 %v521
        %639 = vmatpush.msra.mxu0 %v520
        %640 = vmatpush.msra.mxu0 %v519
        %641 = vmatpush.msra.mxu0 %v518
        %642 = vmatpush.msra.mxu0 %v517
        %643 = vmatpush.msra.mxu0 %v516
        %644 = vmatpush.msra.mxu0 %v515
        %645 = vmatpush.msra.mxu0 %v514
        %646 = vmatpush.msra.mxu0 %v513
        %647 = vmatpush.msra.mxu0 %v512
        %648 = vmatpush.msra.mxu0 %v511
        %649 = vmatpush.msra.mxu0 %v510
        %650 = vmatpush.msra.mxu0 %v509
        %651 = vmatmul.f32.gmra.mxu0 %v505
        %v652 = vpop.f32.mrf.mxu0
        %v653 = vadd.f32 %v630, %v652
        %654 = vmatmul.f32.gmra.mxu0 %v507
        %v655 = vpop.f32.mrf.mxu0
        %v656 = vadd.f32 %v633, %v655
        %657 = vdwg.mxu0
        %658 = vmatpush.msra.mxu0 %v540
        %659 = vmatpush.msra.mxu0 %v539
        %660 = vmatpush.msra.mxu0 %v538
        %661 = vmatpush.msra.mxu0 %v537
        %662 = vmatpush.msra.mxu0 %v536
        %663 = vmatpush.msra.mxu0 %v535
        %664 = vmatpush.msra.mxu0 %v534
        %665 = vmatpush.msra.mxu0 %v533
        %666 = vmatpush.msra.mxu0 %v532
        %667 = vmatpush.msra.mxu0 %v531
        %668 = vmatpush.msra.mxu0 %v530
        %669 = vmatpush.msra.mxu0 %v529
        %670 = vmatpush.msra.mxu0 %v528
        %671 = vmatpush.msra.mxu0 %v527
        %672 = vmatpush.msra.mxu0 %v526
        %673 = vmatpush.msra.mxu0 %v525
        %674 = vmatmul.f32.gmra.mxu0 %v506
        %v675 = vpop.f32.mrf.mxu0
        %v676 = vadd.f32 %v653, %v675
        %677 = vmatmul.f32.gmra.mxu0 %v508
        %v678 = vpop.f32.mrf.mxu0
        %v679 = vadd.f32 %v656, %v678
        %680 = vdwg.mxu0
        %s681 = scalar_lea.vmem %s3, 512
        %v682 = vld [vmem:[%s681] sm:$0xff]
        %v683 = vld [vmem:[%s681 + $0x8] sm:$0xff]
        %v684 = vld [vmem:[%s681 + $0x10] sm:$0xff]
        %v685 = vld [vmem:[%s681 + $0x18] sm:$0xff]
        %v686 = vld [vmem:[%s681 + $0x20] sm:$0xff]
        %v687 = vld [vmem:[%s681 + $0x28] sm:$0xff]
        %v688 = vld [vmem:[%s681 + $0x30] sm:$0xff]
        %v689 = vld [vmem:[%s681 + $0x38] sm:$0xff]
        %v690 = vld [vmem:[%s681 + $0x40] sm:$0xff]
        %v691 = vld [vmem:[%s681 + $0x48] sm:$0xff]
        %v692 = vld [vmem:[%s681 + $0x50] sm:$0xff]
        %v693 = vld [vmem:[%s681 + $0x58] sm:$0xff]
        %v694 = vld [vmem:[%s681 + $0x60] sm:$0xff]
        %v695 = vld [vmem:[%s681 + $0x68] sm:$0xff]
        %v696 = vld [vmem:[%s681 + $0x70] sm:$0xff]
        %v697 = vld [vmem:[%s681 + $0x78] sm:$0xff]
        %v698 = vld [vmem:[%s681 + $0x80] sm:$0xff]
        %v699 = vld [vmem:[%s681 + $0x88] sm:$0xff]
        %v700 = vld [vmem:[%s681 + $0x90] sm:$0xff]
        %v701 = vld [vmem:[%s681 + $0x98] sm:$0xff]
        %v702 = vld [vmem:[%s681 + $0xa0] sm:$0xff]
        %v703 = vld [vmem:[%s681 + $0xa8] sm:$0xff]
        %v704 = vld [vmem:[%s681 + $0xb0] sm:$0xff]
        %v705 = vld [vmem:[%s681 + $0xb8] sm:$0xff]
        %v706 = vld [vmem:[%s681 + $0xc0] sm:$0xff]
        %v707 = vld [vmem:[%s681 + $0xc8] sm:$0xff]
        %v708 = vld [vmem:[%s681 + $0xd0] sm:$0xff]
        %v709 = vld [vmem:[%s681 + $0xd8] sm:$0xff]
        %v710 = vld [vmem:[%s681 + $0xe0] sm:$0xff]
        %v711 = vld [vmem:[%s681 + $0xe8] sm:$0xff]
        %v712 = vld [vmem:[%s681 + $0xf0] sm:$0xff]
        %v713 = vld [vmem:[%s681 + $0xf8] sm:$0xff]
        %vm714 = vcmask 1045504
        %v715 = vrot.slane %v505, 2
        %v716 = vrot.slane %v507, 2
        %v717 = vsel %vm714, %v715, %v716
        %v718 = vrot.slane %v506, 2
        %v719 = vrot.slane %v508, 2
        %v720 = vsel %vm714, %v718, %v719
        %725 = vmatpush.msra.mxu0 %v697
        %726 = vmatpush.msra.mxu0 %v696
        %727 = vmatpush.msra.mxu0 %v695
        %728 = vmatpush.msra.mxu0 %v694
        %729 = vmatpush.msra.mxu0 %v693
        %730 = vmatpush.msra.mxu0 %v692
        %731 = vmatpush.msra.mxu0 %v691
        %732 = vmatpush.msra.mxu0 %v690
        %733 = vmatpush.msra.mxu0 %v689
        %734 = vmatpush.msra.mxu0 %v688
        %735 = vmatpush.msra.mxu0 %v687
        %736 = vmatpush.msra.mxu0 %v686
        %737 = vmatpush.msra.mxu0 %v685
        %738 = vmatpush.msra.mxu0 %v684
        %739 = vmatpush.msra.mxu0 %v683
        %740 = vmatpush.msra.mxu0 %v682
        %741 = vmatmul.f32.gmra.mxu0 %v717
        %v742 = vpop.f32.mrf.mxu0
        %v743 = vadd.f32 0.0, %v742
        %744 = vmatmul.f32.gmra.mxu0 %v716
        %v745 = vpop.f32.mrf.mxu0
        %v746 = vadd.f32 0.0, %v745
        %747 = vdwg.mxu0
        %748 = vmatpush.msra.mxu0 %v713
        %749 = vmatpush.msra.mxu0 %v712
        %750 = vmatpush.msra.mxu0 %v711
        %751 = vmatpush.msra.mxu0 %v710
        %752 = vmatpush.msra.mxu0 %v709
        %753 = vmatpush.msra.mxu0 %v708
        %754 = vmatpush.msra.mxu0 %v707
        %755 = vmatpush.msra.mxu0 %v706
        %756 = vmatpush.msra.mxu0 %v705
        %757 = vmatpush.msra.mxu0 %v704
        %758 = vmatpush.msra.mxu0 %v703
        %759 = vmatpush.msra.mxu0 %v702
        %760 = vmatpush.msra.mxu0 %v701
        %761 = vmatpush.msra.mxu0 %v700
        %762 = vmatpush.msra.mxu0 %v699
        %763 = vmatpush.msra.mxu0 %v698
        %764 = vmatmul.f32.gmra.mxu0 %v720
        %v765 = vpop.f32.mrf.mxu0
        %v766 = vadd.f32 %v743, %v765
        %767 = vmatmul.f32.gmra.mxu0 %v719
        %v768 = vpop.f32.mrf.mxu0
        %v769 = vadd.f32 %v746, %v768
        %770 = vdwg.mxu0
        %v771 = vadd.f32 %v676, %v766
        %v772 = vadd.f32 %v679, %v769
        %v773 = vld [vmem:[%s4] sm:$0x1]
        %v775 = vperm.slane %v773, 0
        %v777 = vadd.f32 %v771, %v775
        %v778 = vadd.f32 %v772, %v775
        %vm779 = vcmp.ge.f32.partialorder %v777, 0.0
        %vm780 = vcmp.ge.f32.partialorder %v778, 0.0
        %v781 = vmul.f32 %v777, 0.01
        %v782 = vmul.f32 %v778, 0.01
        %v783 = vsel %vm779, %v777, %v781
        %v784 = vsel %vm780, %v778, %v782
        %s785 = ssub.s32 %s384, 2
        %v786 = vstv %s785
        %v787 = vadd.s32 %v489, %v786
        %v788 = vadd.s32 %v490, %v786
        %vm789 = vcmp.ge.s32.totalorder %v787, 0
        %vm790 = vcmp.ge.s32.totalorder %v788, 0
        %vm791 = vcmp.lt.s32.totalorder %v787, 16
        %vm792 = vcmp.lt.s32.totalorder %v788, 16
        %vm793 = vmand %vm789, %vm791
        %vm794 = vmand %vm790, %vm792
        %v795 = vsel %vm793, 1, 0
        %v796 = vsel %vm794, 1, 0
        %vm797 = vcmp.eq.s32.totalorder %v795, 1
        %vm798 = vcmp.eq.s32.totalorder %v796, 1
        %v799 = vsel %vm797, %v783, 0.0
        %v800 = vsel %vm798, %v784, 0.0
        %v801 = vld [vmem:[%s5] sm:$0xff]
        %v802 = vld [vmem:[%s5 + $0x8] sm:$0xff]
        %v803 = vld [vmem:[%s5 + $0x10] sm:$0xff]
        %v804 = vld [vmem:[%s5 + $0x18] sm:$0xff]
        %v805 = vld [vmem:[%s5 + $0x20] sm:$0xff]
        %v806 = vld [vmem:[%s5 + $0x28] sm:$0xff]
        %v807 = vld [vmem:[%s5 + $0x30] sm:$0xff]
        %v808 = vld [vmem:[%s5 + $0x38] sm:$0xff]
        %v809 = vld [vmem:[%s5 + $0x40] sm:$0xff]
        %v810 = vld [vmem:[%s5 + $0x48] sm:$0xff]
        %v811 = vld [vmem:[%s5 + $0x50] sm:$0xff]
        %v812 = vld [vmem:[%s5 + $0x58] sm:$0xff]
        %v813 = vld [vmem:[%s5 + $0x60] sm:$0xff]
        %v814 = vld [vmem:[%s5 + $0x68] sm:$0xff]
        %v815 = vld [vmem:[%s5 + $0x70] sm:$0xff]
        %v816 = vld [vmem:[%s5 + $0x78] sm:$0xff]
        %s817 = scalar_lea.vmem %s5, 128
        %v818 = vld [vmem:[%s817] sm:$0xff]
        %v819 = vld [vmem:[%s817 + $0x8] sm:$0xff]
        %v820 = vld [vmem:[%s817 + $0x10] sm:$0xff]
        %v821 = vld [vmem:[%s817 + $0x18] sm:$0xff]
        %v822 = vld [vmem:[%s817 + $0x20] sm:$0xff]
        %v823 = vld [vmem:[%s817 + $0x28] sm:$0xff]
        %v824 = vld [vmem:[%s817 + $0x30] sm:$0xff]
        %v825 = vld [vmem:[%s817 + $0x38] sm:$0xff]
        %v826 = vld [vmem:[%s817 + $0x40] sm:$0xff]
        %v827 = vld [vmem:[%s817 + $0x48] sm:$0xff]
        %v828 = vld [vmem:[%s817 + $0x50] sm:$0xff]
        %v829 = vld [vmem:[%s817 + $0x58] sm:$0xff]
        %v830 = vld [vmem:[%s817 + $0x60] sm:$0xff]
        %v831 = vld [vmem:[%s817 + $0x68] sm:$0xff]
        %v832 = vld [vmem:[%s817 + $0x70] sm:$0xff]
        %v833 = vld [vmem:[%s817 + $0x78] sm:$0xff]
        %v836 = vrot.slane %v799, 1
        %v837 = vrot.slane %v800, 1
        %v838 = vsel %vm578, %v836, %v837
        %841 = vmatpush.msra.mxu0 %v833
        %842 = vmatpush.msra.mxu0 %v832
        %843 = vmatpush.msra.mxu0 %v831
        %844 = vmatpush.msra.mxu0 %v830
        %845 = vmatpush.msra.mxu0 %v829
        %846 = vmatpush.msra.mxu0 %v828
        %847 = vmatpush.msra.mxu0 %v827
        %848 = vmatpush.msra.mxu0 %v826
        %849 = vmatpush.msra.mxu0 %v825
        %850 = vmatpush.msra.mxu0 %v824
        %851 = vmatpush.msra.mxu0 %v823
        %852 = vmatpush.msra.mxu0 %v822
        %853 = vmatpush.msra.mxu0 %v821
        %854 = vmatpush.msra.mxu0 %v820
        %855 = vmatpush.msra.mxu0 %v819
        %856 = vmatpush.msra.mxu0 %v818
        %857 = vmatmul.f32.gmra.mxu0 %v838
        %v858 = vpop.f32.mrf.mxu0
        %v859 = vadd.f32 0.0, %v858
        %860 = vmatmul.f32.gmra.mxu0 %v837
        %v861 = vpop.f32.mrf.mxu0
        %v862 = vadd.f32 0.0, %v861
        %863 = vdwg.mxu0
        %864 = vmatpush.msra.mxu0 %v816
        %865 = vmatpush.msra.mxu0 %v815
        %866 = vmatpush.msra.mxu0 %v814
        %867 = vmatpush.msra.mxu0 %v813
        %868 = vmatpush.msra.mxu0 %v812
        %869 = vmatpush.msra.mxu0 %v811
        %870 = vmatpush.msra.mxu0 %v810
        %871 = vmatpush.msra.mxu0 %v809
        %872 = vmatpush.msra.mxu0 %v808
        %873 = vmatpush.msra.mxu0 %v807
        %874 = vmatpush.msra.mxu0 %v806
        %875 = vmatpush.msra.mxu0 %v805
        %876 = vmatpush.msra.mxu0 %v804
        %877 = vmatpush.msra.mxu0 %v803
        %878 = vmatpush.msra.mxu0 %v802
        %879 = vmatpush.msra.mxu0 %v801
        %880 = vmatmul.f32.gmra.mxu0 %v799
        %v881 = vpop.f32.mrf.mxu0
        %v882 = vadd.f32 %v859, %v881
        %883 = vmatmul.f32.gmra.mxu0 %v800
        %v884 = vpop.f32.mrf.mxu0
        %v885 = vadd.f32 %v862, %v884
        %886 = vdwg.mxu0
        %s887 = scalar_lea.vmem %s5, 256
        %v888 = vld [vmem:[%s887] sm:$0xff]
        %v889 = vld [vmem:[%s887 + $0x8] sm:$0xff]
        %v890 = vld [vmem:[%s887 + $0x10] sm:$0xff]
        %v891 = vld [vmem:[%s887 + $0x18] sm:$0xff]
        %v892 = vld [vmem:[%s887 + $0x20] sm:$0xff]
        %v893 = vld [vmem:[%s887 + $0x28] sm:$0xff]
        %v894 = vld [vmem:[%s887 + $0x30] sm:$0xff]
        %v895 = vld [vmem:[%s887 + $0x38] sm:$0xff]
        %v896 = vld [vmem:[%s887 + $0x40] sm:$0xff]
        %v897 = vld [vmem:[%s887 + $0x48] sm:$0xff]
        %v898 = vld [vmem:[%s887 + $0x50] sm:$0xff]
        %v899 = vld [vmem:[%s887 + $0x58] sm:$0xff]
        %v900 = vld [vmem:[%s887 + $0x60] sm:$0xff]
        %v901 = vld [vmem:[%s887 + $0x68] sm:$0xff]
        %v902 = vld [vmem:[%s887 + $0x70] sm:$0xff]
        %v903 = vld [vmem:[%s887 + $0x78] sm:$0xff]
        %v904 = vrot.slane %v799, 2
        %v905 = vrot.slane %v800, 2
        %v906 = vsel %vm714, %v904, %v905
        %909 = vmatpush.msra.mxu0 %v903
        %910 = vmatpush.msra.mxu0 %v902
        %911 = vmatpush.msra.mxu0 %v901
        %912 = vmatpush.msra.mxu0 %v900
        %913 = vmatpush.msra.mxu0 %v899
        %914 = vmatpush.msra.mxu0 %v898
        %915 = vmatpush.msra.mxu0 %v897
        %916 = vmatpush.msra.mxu0 %v896
        %917 = vmatpush.msra.mxu0 %v895
        %918 = vmatpush.msra.mxu0 %v894
        %919 = vmatpush.msra.mxu0 %v893
        %920 = vmatpush.msra.mxu0 %v892
        %921 = vmatpush.msra.mxu0 %v891
        %922 = vmatpush.msra.mxu0 %v890
        %923 = vmatpush.msra.mxu0 %v889
        %924 = vmatpush.msra.mxu0 %v888
        %925 = vmatmul.f32.gmra.mxu0 %v906
        %v926 = vpop.f32.mrf.mxu0
        %v927 = vadd.f32 0.0, %v926
        %928 = vmatmul.f32.gmra.mxu0 %v905
        %v929 = vpop.f32.mrf.mxu0
        %v930 = vadd.f32 0.0, %v929
        %931 = vdwg.mxu0
        %v932 = vadd.f32 %v882, %v927
        %v933 = vadd.f32 %v885, %v930
        %v934 = vld [vmem:[%s6] sm:$0x1]
        %v936 = vperm.slane %v934, 0
        %v938 = vadd.f32 %v932, %v936
        %v939 = vadd.f32 %v933, %v936
        %vm940 = vcmp.ge.f32.partialorder %v938, 0.0
        %vm941 = vcmp.ge.f32.partialorder %v939, 0.0
        %v942 = vmul.f32 %v938, 0.01
        %v943 = vmul.f32 %v939, 0.01
        %v944 = vsel %vm940, %v938, %v942
        %v945 = vsel %vm941, %v939, %v943
        %s946 = ssub.s32 %s384, 1
        %v947 = vstv %s946
        %v948 = vadd.s32 %v489, %v947
        %v949 = vadd.s32 %v490, %v947
        %vm950 = vcmp.ge.s32.totalorder %v948, 0
        %vm951 = vcmp.ge.s32.totalorder %v949, 0
        %vm952 = vcmp.lt.s32.totalorder %v948, 16
        %vm953 = vcmp.lt.s32.totalorder %v949, 16
        %vm954 = vmand %vm950, %vm952
        %vm955 = vmand %vm951, %vm953
        %v956 = vsel %vm954, 1, 0
        %v957 = vsel %vm955, 1, 0
        %vm958 = vcmp.eq.s32.totalorder %v956, 1
        %vm959 = vcmp.eq.s32.totalorder %v957, 1
        %v960 = vsel %vm958, %v944, 0.0
        %v961 = vsel %vm959, %v945, 0.0
        %v962 = vld [vmem:[%s7] sm:$0xff]
        %v963 = vld [vmem:[%s7 + $0x8] sm:$0xff]
        %v964 = vld [vmem:[%s7 + $0x10] sm:$0xff]
        %v965 = vld [vmem:[%s7 + $0x18] sm:$0xff]
        %v966 = vld [vmem:[%s7 + $0x20] sm:$0xff]
        %v967 = vld [vmem:[%s7 + $0x28] sm:$0xff]
        %v968 = vld [vmem:[%s7 + $0x30] sm:$0xff]
        %v969 = vld [vmem:[%s7 + $0x38] sm:$0xff]
        %s970 = scalar_lea.vmem %s7, 64
        %v971 = vld [vmem:[%s970] sm:$0xff]
        %v972 = vld [vmem:[%s970 + $0x8] sm:$0xff]
        %v973 = vld [vmem:[%s970 + $0x10] sm:$0xff]
        %v974 = vld [vmem:[%s970 + $0x18] sm:$0xff]
        %v975 = vld [vmem:[%s970 + $0x20] sm:$0xff]
        %v976 = vld [vmem:[%s970 + $0x28] sm:$0xff]
        %v977 = vld [vmem:[%s970 + $0x30] sm:$0xff]
        %v978 = vld [vmem:[%s970 + $0x38] sm:$0xff]
        %v981 = vrot.slane %v960, 1
        %v982 = vrot.slane %v961, 1
        %v983 = vsel %vm578, %v981, %v982
        %vm984 = vcmask 523264
        %v985 = vsel %vm984, %v983, 0
        %987 = vmatpush.msra.mxu0 0.0
        %988 = vmatpush.msra.mxu0 0.0
        %989 = vmatpush.msra.mxu0 0.0
        %990 = vmatpush.msra.mxu0 0.0
        %991 = vmatpush.msra.mxu0 0.0
        %992 = vmatpush.msra.mxu0 0.0
        %993 = vmatpush.msra.mxu0 0.0
        %994 = vmatpush.msra.mxu0 0.0
        %995 = vmatpush.msra.mxu0 %v978
        %996 = vmatpush.msra.mxu0 %v977
        %997 = vmatpush.msra.mxu0 %v976
        %998 = vmatpush.msra.mxu0 %v975
        %999 = vmatpush.msra.mxu0 %v974
        %1000 = vmatpush.msra.mxu0 %v973
        %1001 = vmatpush.msra.mxu0 %v972
        %1002 = vmatpush.msra.mxu0 %v971
        %1003 = vmatmul.f32.gmra.mxu0 %v985
        %v1004 = vpop.f32.mrf.mxu0
        %v1005 = vadd.f32 0.0, %v1004
        %1006 = vdwg.mxu0
        %v1007 = vsel %vm984, %v960, 0
        %1009 = vmatpush.msra.mxu0 0.0
        %1010 = vmatpush.msra.mxu0 0.0
        %1011 = vmatpush.msra.mxu0 0.0
        %1012 = vmatpush.msra.mxu0 0.0
        %1013 = vmatpush.msra.mxu0 0.0
        %1014 = vmatpush.msra.mxu0 0.0
        %1015 = vmatpush.msra.mxu0 0.0
        %1016 = vmatpush.msra.mxu0 0.0
        %1017 = vmatpush.msra.mxu0 %v969
        %1018 = vmatpush.msra.mxu0 %v968
        %1019 = vmatpush.msra.mxu0 %v967
        %1020 = vmatpush.msra.mxu0 %v966
        %1021 = vmatpush.msra.mxu0 %v965
        %1022 = vmatpush.msra.mxu0 %v964
        %1023 = vmatpush.msra.mxu0 %v963
        %1024 = vmatpush.msra.mxu0 %v962
        %1025 = vmatmul.f32.gmra.mxu0 %v1007
        %v1026 = vpop.f32.mrf.mxu0
        %v1027 = vadd.f32 %v1005, %v1026
        %1028 = vdwg.mxu0
        %s1029 = scalar_lea.vmem %s7, 128
        %v1030 = vld [vmem:[%s1029] sm:$0xff]
        %v1031 = vld [vmem:[%s1029 + $0x8] sm:$0xff]
        %v1032 = vld [vmem:[%s1029 + $0x10] sm:$0xff]
        %v1033 = vld [vmem:[%s1029 + $0x18] sm:$0xff]
        %v1034 = vld [vmem:[%s1029 + $0x20] sm:$0xff]
        %v1035 = vld [vmem:[%s1029 + $0x28] sm:$0xff]
        %v1036 = vld [vmem:[%s1029 + $0x30] sm:$0xff]
        %v1037 = vld [vmem:[%s1029 + $0x38] sm:$0xff]
        %v1038 = vrot.slane %v960, 2
        %v1039 = vrot.slane %v961, 2
        %v1040 = vsel %vm714, %v1038, %v1039
        %v1041 = vsel %vm984, %v1040, 0
        %1043 = vmatpush.msra.mxu0 0.0
        %1044 = vmatpush.msra.mxu0 0.0
        %1045 = vmatpush.msra.mxu0 0.0
        %1046 = vmatpush.msra.mxu0 0.0
        %1047 = vmatpush.msra.mxu0 0.0
        %1048 = vmatpush.msra.mxu0 0.0
        %1049 = vmatpush.msra.mxu0 0.0
        %1050 = vmatpush.msra.mxu0 0.0
        %1051 = vmatpush.msra.mxu0 %v1037
        %1052 = vmatpush.msra.mxu0 %v1036
        %1053 = vmatpush.msra.mxu0 %v1035
        %1054 = vmatpush.msra.mxu0 %v1034
        %1055 = vmatpush.msra.mxu0 %v1033
        %1056 = vmatpush.msra.mxu0 %v1032
        %1057 = vmatpush.msra.mxu0 %v1031
        %1058 = vmatpush.msra.mxu0 %v1030
        %1059 = vmatmul.f32.gmra.mxu0 %v1041
        %v1060 = vpop.f32.mrf.mxu0
        %v1061 = vadd.f32 0.0, %v1060
        %1062 = vdwg.mxu0
        %v1063 = vadd.f32 %v1027, %v1061
        %v1064 = vld [vmem:[%s8] sm:$0x1]
        %v1066 = vperm.slane %v1064, 0
        %v1068 = vadd.f32 %v1063, %v1066
        %vm1069 = vcmask 15360
        %1070 = vst.msk [vmem:[%s383] sm:$0xff] %vm1069, %v1068
        %p1071 = scmp.lt.s32.totalorder %s25, 1
        %s1072 = scalar_select %p1071, %s25, 1
        %p1073 = scmp.lt.s32.totalorder %s26, 1
        %s1074 = scalar_select %p1073, %s26, 1
        %s1075 = smul.addr %s1072, 2
        %s1076 = sadd.s32 %s1074, %s1075
        %s1077 = smul.addr %s1076, 8
        %s1078 = scalar_lea.vmem %s9, %s1077
        // Predicated region
        $region61: #{tpu_custom_call.1} parent=55 // pred_check
          %p1079 = pneg %p249
        $region62: #{tpu_custom_call.1} parent=55 // pred_check_branch
          %1081 = sbr.rel (%p1079) target = $region64
        $region63: #{tpu_custom_call.1} parent=55 // pred_region
          _
        $region64: #{tpu_custom_call.1} parent=55 // pred_fallthru
          _
      $region56: #{tpu_custom_call.1} parent=5 // pred_fallthru
        _
      %p1082 = scmp.le.s32.totalorder 2, %s16
      // Predicated region
      $region65: #{tpu_custom_call.1} parent=5 // pred_check
        %p1083 = pneg %p1082
      $region66: #{tpu_custom_call.1} parent=5 // pred_check_branch
        %1085 = sbr.rel (%p1083) target = $region68
      $region67: #{tpu_custom_call.1} parent=5 // pred_region
        %s1086 = ssub.s32 %s16, 2
        // Predicated region
        $region69: #{tpu_custom_call.1} parent=67 // pred_check
          %p1087 = pneg %p255
        $region70: #{tpu_custom_call.1} parent=67 // pred_check_branch
          %1089 = sbr.rel (%p1087) target = $region72
        $region71: #{tpu_custom_call.1} parent=67 // pred_region
          %p1090 = scmp.lt.s32.totalorder %s27, 1
          %s1091 = scalar_select %p1090, %s27, 1
          %p1092 = scmp.lt.s32.totalorder %s28, 1
          %s1093 = scalar_select %p1092, %s28, 1
          %s1094 = smul.addr %s1091, 2
          %s1095 = sadd.s32 %s1093, %s1094
          %s1096 = smul.addr %s1095, 8
          %s1097 = scalar_lea.vmem %s9, %s1096
        $region72: #{tpu_custom_call.1} parent=67 // pred_fallthru
          _
      $region68: #{tpu_custom_call.1} parent=5 // pred_fallthru
        _
    $region6: #{tpu_custom_call.1} parent=1 // loop_footer
      %s20 = sadd.s32 1, %s16
    $region7: #{tpu_custom_call.1} parent=1 // loop_footer_branch
      %15 = sbr.rel target = $region3
    $region8: #{tpu_custom_call.1} parent=1 // loop_exit
      _
    %1098 = vsyncpa [#allocation3], 1
    %s1099 = scalar_lea.sflag [#allocation3], 1
    %1100 = vsyncpa %s1099, 1

</llo_original>
